<compile_context>
chip_gen: v7x
topology: tpu7x:2x2x1
jax: 0.10.0
libtpu: 0.0.40
codegen_flags: <defaults>
</compile_context>

<pallas_src>
import functools

import jax
import jax.numpy as jnp
from jax.experimental import pallas as pl
from jax.experimental.pallas import tpu as pltpu

BN_EPS = 1e-5
_LANE = 128
_SUBLANE = 8


def _round_up(v, m):
    return -(-v // m) * m


def _vmem_limit(est_bytes):
    # generous double-buffer + compiler-scratch headroom, capped below v7x's 64 MiB/TC.
    return int(min(2 * est_bytes + (12 << 20), 64 << 20))


# --------------------------- Pallas kernels ---------------------------------

def _conv_tap_kernel(p_ref, w_ref, o_ref, sum_ref, ssq_ref, acc_ref):
    """One depth-tap of the conv: acc += P[n, d*sd+i] @ W[i]; finalize -> bf16 + stats."""
    i = pl.program_id(2)

    @pl.when(i == 0)
    def _init():
        acc_ref[...] = jnp.zeros_like(acc_ref)

    acc_ref[...] += jnp.dot(p_ref[0, 0], w_ref[i],
                            preferred_element_type=jnp.float32)

    @pl.when(i == pl.num_programs(2) - 1)
    def _finalize():
        a = acc_ref[...]                                   # (R, Cp) f32
        o_ref[0, 0] = a.astype(o_ref.dtype)
        # Column sums / sums-of-squares on the MXU (ones-matmul) instead of XLU.
        ones = jnp.ones((_SUBLANE, a.shape[0]), jnp.float32)
        sum_ref[0, 0] = jnp.dot(ones, a, preferred_element_type=jnp.float32)
        ssq_ref[0, 0] = jnp.dot(ones, a * a, preferred_element_type=jnp.float32)


def _make_bn_apply_kernel(has_residual, relu):
    """y = x*scale + shift (+residual)(+ReLU); bf16 in/out, f32 math."""
    def kernel(*refs):
        if has_residual:
            x_ref, scale_ref, shift_ref, r_ref, o_ref = refs
        else:
            x_ref, scale_ref, shift_ref, o_ref = refs
        y = x_ref[...].astype(jnp.float32) * scale_ref[...] + shift_ref[...]
        if has_residual:
            y = y + r_ref[...].astype(jnp.float32)
        if relu:
            y = jnp.maximum(y, 0.0)
        o_ref[...] = y.astype(o_ref.dtype)
    return kernel


def _make_maxpool_kernel(ho, k, s):
    """Running max over the D-tap grid axis; the H window is reduced in-kernel."""
    def kernel(x_ref, o_ref):
        i = pl.program_id(2)
        v = x_ref[0, 0]                                    # (Hp, Wp, Cp)
        wp, cp = v.shape[1], v.shape[2]
        hmax = None
        for j in range(k):
            # stride-s selection via leading-dim reshape (no strided vector access)
            tap = v[j:j + s * ho].reshape(ho, s, wp, cp)[:, 0]
            hmax = tap if hmax is None else jnp.maximum(hmax, tap)

        @pl.when(i == 0)
        def _init():
            o_ref[0, 0] = hmax

        @pl.when(i > 0)
        def _acc():
            o_ref[0, 0] = jnp.maximum(o_ref[0, 0], hmax)
    return kernel


def _linear_kernel(x_ref, w_ref, b_ref, o_ref, acc_ref):
    k = pl.program_id(0)

    @pl.when(k == 0)
    def _init():
        acc_ref[...] = jnp.zeros_like(acc_ref)

    acc_ref[...] += jnp.dot(x_ref[...], w_ref[...],
                            preferred_element_type=jnp.float32)

    @pl.when(k == pl.num_programs(0) - 1)
    def _finalize():
        o_ref[...] = (acc_ref[...] + b_ref[...]).astype(o_ref.dtype)


# ---------------------- cached pallas_call factories -------------------------

@functools.lru_cache(maxsize=None)
def _conv_call(N, Dp, Do, R, Kp, Cp, kd, sd):
    est = (2 * R * Kp * 2 +            # streamed P blocks (bf16, double-buffered)
           kd * Kp * Cp * 2 +          # resident bf16 weight
           2 * R * Cp * 2 +            # bf16 output block
           4 * _SUBLANE * Cp * 4 +     # stats blocks
           R * Cp * 4)                 # f32 accumulator
    return pl.pallas_call(
        _conv_tap_kernel,
        out_shape=[jax.ShapeDtypeStruct((N, Do, R, Cp), jnp.bfloat16),
                   jax.ShapeDtypeStruct((N, Do, _SUBLANE, Cp), jnp.float32),
                   jax.ShapeDtypeStruct((N, Do, _SUBLANE, Cp), jnp.float32)],
        grid=(N, Do, kd),
        in_specs=[pl.BlockSpec((1, 1, R, Kp), lambda n, d, i: (n, d * sd + i, 0, 0)),
                  pl.BlockSpec((kd, Kp, Cp), lambda n, d, i: (0, 0, 0))],
        out_specs=[pl.BlockSpec((1, 1, R, Cp), lambda n, d, i: (n, d, 0, 0)),
                   pl.BlockSpec((1, 1, _SUBLANE, Cp), lambda n, d, i: (n, d, 0, 0)),
                   pl.BlockSpec((1, 1, _SUBLANE, Cp), lambda n, d, i: (n, d, 0, 0))],
        scratch_shapes=[pltpu.VMEM((R, Cp), jnp.float32)],
        compiler_params=pltpu.CompilerParams(
            dimension_semantics=("parallel", "parallel", "arbitrary"),
            vmem_limit_bytes=_vmem_limit(est)),
    )


@functools.lru_cache(maxsize=None)
def _bn_apply_call(ND, R, Cp, has_residual, relu):
    est = (2 + 2 * int(has_residual)) * R * Cp * 2 + 2 * R * Cp * 2 + 4 * Cp * 4
    in_specs = [pl.BlockSpec((1, R, Cp), lambda m: (m, 0, 0)),
                pl.BlockSpec((1, Cp), lambda m: (0, 0)),
                pl.BlockSpec((1, Cp), lambda m: (0, 0))]
    if has_residual:
        in_specs.append(pl.BlockSpec((1, R, Cp), lambda m: (m, 0, 0)))
    return pl.pallas_call(
        _make_bn_apply_kernel(has_residual, relu),
        out_shape=jax.ShapeDtypeStruct((ND, R, Cp), jnp.bfloat16),
        grid=(ND,),
        in_specs=in_specs,
        out_specs=pl.BlockSpec((1, R, Cp), lambda m: (m, 0, 0)),
        compiler_params=pltpu.CompilerParams(
            dimension_semantics=("parallel",),
            vmem_limit_bytes=_vmem_limit(est)),
    )


@functools.lru_cache(maxsize=None)
def _maxpool_call(N, Dp, Do, Hp, Ho, Wp, Cp, k, s):
    est = 2 * Hp * Wp * Cp * 2 + 2 * Ho * Wp * Cp * 2
    return pl.pallas_call(
        _make_maxpool_kernel(Ho, k, s),
        out_shape=jax.ShapeDtypeStruct((N, Do, Ho, Wp, Cp), jnp.bfloat16),
        grid=(N, Do, k),
        in_specs=[pl.BlockSpec((1, 1, Hp, Wp, Cp),
                               lambda n, d, i: (n, d * s + i, 0, 0, 0))],
        out_specs=pl.BlockSpec((1, 1, Ho, Wp, Cp), lambda n, d, i: (n, d, 0, 0, 0)),
        compiler_params=pltpu.CompilerParams(
            dimension_semantics=("parallel", "parallel", "arbitrary"),
            vmem_limit_bytes=_vmem_limit(est)),
    )


@functools.lru_cache(maxsize=None)
def _linear_call(Mp, Kp, Np, tk):
    nk = Kp // tk
    est = 2 * Mp * tk * 2 + 2 * tk * Np * 2 + Np * 4 + 2 * Mp * Np * 4 + Mp * Np * 4
    return pl.pallas_call(
        _linear_kernel,
        out_shape=jax.ShapeDtypeStruct((Mp, Np), jnp.float32),
        grid=(nk,),
        in_specs=[pl.BlockSpec((Mp, tk), lambda k: (0, k)),
                  pl.BlockSpec((tk, Np), lambda k: (k, 0)),
                  pl.BlockSpec((1, Np), lambda k: (0, 0))],
        out_specs=pl.BlockSpec((Mp, Np), lambda k: (0, 0)),
        scratch_shapes=[pltpu.VMEM((Mp, Np), jnp.float32)],
        compiler_params=pltpu.CompilerParams(
            dimension_semantics=("arbitrary",),
            vmem_limit_bytes=_vmem_limit(est)),
    )


# ------------------------------- wrappers ------------------------------------

def _gather_hw(x, kh, kw, sh, sw, ph, pw):
    """H/W im2col (tap-major, channel-minor) on a channels-last (N, D, H, W, C) array."""
    xp = jnp.pad(x, ((0, 0), (0, 0), (ph, ph), (pw, pw), (0, 0)))
    _, _, Hp, Wp, _ = xp.shape
    oh = (Hp - kh) // sh + 1
    ow = (Wp - kw) // sw + 1
    cols = []
    for j in range(kh):
        for l in range(kw):
            cols.append(xp[:, :, j:j + sh * oh:sh, l:l + sw * ow:sw, :])
    # TODO(synk): the remaining kh*kw explicit gather could become fully implicit
    # im2col with memory_space=pl.ANY + make_async_copy haloed-slab DMA in-kernel.
    return jnp.concatenate(cols, axis=-1), (oh, ow)


@functools.partial(jax.jit, static_argnames=("stride", "padding", "relu"))
def conv3d_bn(x, w, gamma, beta, residual=None, *, stride, padding, relu=True):
    """Conv3d(bias=False) + BatchNorm3d (training-mode batch stats) [+res] [+ReLU].

    x / residual: channels-last bf16 (N, D, H, W, Ce) with Ce lane-padded (conv1: Ce=Cin).
    w: (Cout, Cin, kd, kh, kw) f32.  Output: (N, Do, OH, OW, round_up(Cout, 128)) bf16.
    """
    # TODO(synk): running_mean / running_var are not produced (training-mode forward only).
    N, D, H, W, Ce = x.shape
    Cout, Cin, kd, kh, kw = (int(v) for v in w.shape)
    sd, sh, sw = stride
    pd, ph, pw = padding
    Cp = _round_up(Cout, _LANE)

    xd = jnp.pad(x.astype(jnp.bfloat16), ((0, 0), (pd, pd), (0, 0), (0, 0), (0, 0)))
    P, (oh, ow) = _gather_hw(xd, kh, kw, sh, sw, ph, pw)
    Dp = D + 2 * pd
    Do = (Dp - kd) // sd + 1
    R = oh * ow
    K = kh * kw * Ce
    Kp = _round_up(K, _LANE)
    P = P.reshape(N, Dp, R, K)
    if Kp != K:                                   # only conv1 (Ce=3) hits this
        P = jnp.pad(P, ((0, 0), (0, 0), (0, 0), (0, Kp - K)))

    wt = jnp.transpose(w, (2, 3, 4, 1, 0))        # (kd, kh, kw, Cin, Cout)
    wt = jnp.pad(wt, ((0, 0), (0, 0), (0, 0), (0, Ce - Cin), (0, Cp - Cout)))
    wt = wt.reshape(kd, K, Cp)
    if Kp != K:
        wt = jnp.pad(wt, ((0, 0), (0, Kp - K), (0, 0)))
    wt = wt.astype(jnp.bfloat16)

    conv_out, sums, ssqs = _conv_call(N, Dp, Do, R, Kp, Cp, kd, sd)(P, wt)

    # Global batch statistics: every accumulated row is a real output row (no M
    # padding), so dividing by M = N*Do*R matches the untiled computation.
    M = N * Do * R
    tot = jnp.sum(sums[:, :, 0, :], axis=(0, 1))
    tot2 = jnp.sum(ssqs[:, :, 0, :], axis=(0, 1))
    mean = tot / M
    # NOTE: E[x^2]-mean^2 in f32 (clamped); a Welford pass would cost an extra read.
    var = jnp.maximum(tot2 / M - mean * mean, 0.0)
    g = jnp.pad(gamma, (0, Cp - Cout))            # zero pad keeps padded lanes inert
    b = jnp.pad(beta, (0, Cp - Cout))
    scale = g * jax.lax.rsqrt(var + BN_EPS)
    shift = b - mean * scale

    args = [conv_out.reshape(N * Do, R, Cp), scale.reshape(1, Cp), shift.reshape(1, Cp)]
    if residual is not None:
        args.append(residual.astype(jnp.bfloat16).reshape(N * Do, R, Cp))
    out = _bn_apply_call(N * Do, R, Cp, residual is not None, bool(relu))(*args)
    return out.reshape(N, Do, oh, ow, Cp)


@functools.partial(jax.jit, static_argnames=("k", "s", "p"))
def maxpool3d(x, *, k=3, s=2, p=1):
    """MaxPool3d (implicit -inf padding); channels-last bf16 (N, D, H, W, Cp).

    D taps run as an 'arbitrary' grid axis (index_map offsets, no HBM window stacking);
    the H window is reduced in-kernel; the cheap stride-s W select stays in XLA.
    """
    N, D, H, W, Cp = x.shape
    Do = (D + 2 * p - k) // s + 1
    Ho = (H + 2 * p - k) // s + 1
    Wo = (W + 2 * p - k) // s + 1
    Dp = D + 2 * p
    Hp = max(H + 2 * p, s * Ho + k - 1)           # extra rows for the in-kernel reshape
    Wp = W + 2 * p
    xpad = jnp.pad(x, ((0, 0), (p, p), (p, Hp - H - p), (p, p), (0, 0)),
                   constant_values=-jnp.inf)
    y = _maxpool_call(N, Dp, Do, Hp, Ho, Wp, Cp, k, s)(xpad)   # (N, Do, Ho, Wp, Cp)
    # TODO(synk): stride-s W (sublane) selection done in XLA; in-kernel would need
    # sublane-strided access.
    out = y[:, :, :, 0:s * (Wo - 1) + 1:s, :]
    for l in range(1, k):
        out = jnp.maximum(out, y[:, :, :, l:l + s * (Wo - 1) + 1:s, :])
    return out


@jax.jit
def linear(x, wT, b):
    """y = x @ wT + b with pre-transposed weights wT: (in_features, out_features)."""
    M, K = x.shape
    Nf = wT.shape[1]
    Mp = _round_up(M, _SUBLANE)
    Np = _round_up(Nf, _LANE)
    tk = 256 if K > 256 else _round_up(K, _LANE)
    Kp = _round_up(K, tk)
    xp = jnp.pad(x.astype(jnp.bfloat16), ((0, Mp - M), (0, Kp - K)))
    wp = jnp.pad(wT, ((0, Kp - K), (0, Np - Nf))).astype(jnp.bfloat16)
    bp = jnp.pad(b, (0, Np - Nf)).reshape(1, Np)
    out = _linear_call(Mp, Kp, Np, tk)(xp, wp, bp)
    return out[:M, :Nf]


# ---------------------------- parameter init ----------------------------------

class ParamFactory:
    def __init__(self, seed=0):
        self.key = jax.random.PRNGKey(seed)

    def _next(self):
        self.key, k = jax.random.split(self.key)
        return k

    def conv(self, cout, cin, kd, kh, kw):
        fan_out = cout * kd * kh * kw                 # kaiming_normal_, mode='fan_out'
        std = (2.0 / fan_out) ** 0.5
        return jax.random.normal(self._next(), (cout, cin, kd, kh, kw), jnp.float32) * std

    def bn(self, c):
        return jnp.ones((c,), jnp.float32), jnp.zeros((c,), jnp.float32)

    def linear(self, cout, cin):
        # Pre-transposed weight (in, out): avoids a per-call w.T HBM pass.
        bound = 1.0 / (cin ** 0.5)
        wT = jax.random.uniform(self._next(), (cin, cout), jnp.float32, -bound, bound)
        b = jax.random.uniform(self._next(), (cout,), jnp.float32, -bound, bound)
        return wT, b


def init_resnet_params(pf, block_inplanes, layers, n_input_channels,
                       conv1_t_size, n_classes, fc1_in, fc1_out):
    params = {}
    in_planes = block_inplanes[0]
    params["conv1_w"] = pf.conv(in_planes, n_input_channels, conv1_t_size, 7, 7)
    params["bn1"] = pf.bn(in_planes)
    params["layers"] = []
    for li, (planes, nblocks) in enumerate(zip(block_inplanes, layers)):
        layer_stride = 1 if li == 0 else 2
        blocks = []
        for bi in range(nblocks):
            s = layer_stride if bi == 0 else 1
            blk = {"stride": s}
            blk["conv1_w"] = pf.conv(planes, in_planes, 3, 3, 3)
            blk["bn1"] = pf.bn(planes)
            blk["conv2_w"] = pf.conv(planes, planes, 3, 3, 3)
            blk["bn2"] = pf.bn(planes)
            if s != 1 or in_planes != planes:         # shortcut_type 'B': conv1x1x1 + BN
                blk["down_w"] = pf.conv(planes, in_planes, 1, 1, 1)
                blk["down_bn"] = pf.bn(planes)
            blocks.append(blk)
            in_planes = planes
        params["layers"].append(blocks)
    params["fc1"] = pf.linear(fc1_out, fc1_in)
    params["fc2"] = pf.linear(n_classes, fc1_out)
    return params


# ------------------------------- forward --------------------------------------

def basic_block_forward(x, blk):
    s = blk["stride"]
    if "down_w" in blk:
        residual = conv3d_bn(x, blk["down_w"], blk["down_bn"][0], blk["down_bn"][1],
                             stride=(s, s, s), padding=(0, 0, 0), relu=False)
    else:
        residual = x
    out = conv3d_bn(x, blk["conv1_w"], blk["bn1"][0], blk["bn1"][1],
                    stride=(s, s, s), padding=(1, 1, 1), relu=True)
    # conv2 -> bn2 -> (+= residual) -> relu (residual add + ReLU fused in apply pass)
    out = conv3d_bn(out, blk["conv2_w"], blk["bn2"][0], blk["bn2"][1],
                    residual, stride=(1, 1, 1), padding=(1, 1, 1), relu=True)
    return out


def resnet_forward(x, params, conv1_t_size=7, conv1_t_stride=1, no_max_pool=False):
    # NCDHW (PyTorch) -> channels-last bf16 internally; channels stay lane-padded
    # between layers and padded lanes are kept at exactly zero.
    x = jnp.transpose(x, (0, 2, 3, 4, 1)).astype(jnp.bfloat16)
    x = conv3d_bn(x, params["conv1_w"], params["bn1"][0], params["bn1"][1],
                  stride=(conv1_t_stride, 2, 2),
                  padding=(conv1_t_size // 2, 3, 3), relu=True)
    if not no_max_pool:
        x = maxpool3d(x, k=3, s=2, p=1)
    for blocks in params["layers"]:
        for blk in blocks:
            x = basic_block_forward(x, blk)
    # torch.flatten(x, 1) is over NCDHW (C-major): transpose + drop padded lanes first.
    c_real = params["layers"][-1][-1]["bn2"][0].shape[0]
    x = jnp.transpose(x, (0, 4, 1, 2, 3))[:, :c_real]
    x = x.reshape(x.shape[0], -1)
    x = linear(x, *params["fc1"])          # fc1
    x = linear(x, *params["fc2"])          # fc2
    return x


# --------------------------------- main ----------------------------------------

if __name__ == "__main__":
    # Small, self-consistent shapes (original hard-codes fc1 = Linear(512*8*4*4, 1024)
    # for 3x128x128x128 inputs; here fc1 in-features are derived from the small input).
    key = jax.random.PRNGKey(0)
    x = jax.random.normal(key, (2, 3, 8, 16, 16), jnp.float32)   # N, C, D, H, W

    block_inplanes = [8, 16, 32, 64]     # scaled-down [64, 128, 256, 512]
    layers = [2, 2, 2, 2]                # ResNet-18 (BasicBlock, expansion=1)
    n_classes = 10

    # spatial after conv1(1,2,2) -> maxpool/2 -> layer2/2 -> layer3/2 -> layer4/2:
    # D: 8->8->4->2->1->1 ; H,W: 16->8->4->2->1->1  => flatten = 64*1*1*1
    fc1_in = block_inplanes[3] * 1 * 1 * 1
    fc1_out = 32                         # scaled-down 1024

    pf = ParamFactory(seed=0)
    params = init_resnet_params(pf, block_inplanes, layers,
                                n_input_channels=3, conv1_t_size=7,
                                n_classes=n_classes, fc1_in=fc1_in, fc1_out=fc1_out)

    out = resnet_forward(x, params)
    out = jax.block_until_ready(out)
    assert out.shape == (2, n_classes), out.shape
    assert bool(jnp.all(jnp.isfinite(out)))
    print("KERNEL_OK")
</pallas_src>

<mosaic_0001>
module attributes {stable_mosaic.version = 11 : i64} {
  func.func @_conv_tap_kernel(%arg0: i32, %arg1: i32, %arg2: i32, %arg3: memref<1x1x64x256xbf16, #tpu.memory_space<vmem>>, %arg4: memref<7x256x128xbf16, #tpu.memory_space<vmem>>, %arg5: memref<1x1x64x128xbf16, #tpu.memory_space<vmem>>, %arg6: memref<1x1x8x128xf32, #tpu.memory_space<vmem>>, %arg7: memref<1x1x8x128xf32, #tpu.memory_space<vmem>>, %arg8: memref<64x128xf32, #tpu.memory_space<vmem>>) attributes {dimension_semantics = [#tpu.dimension_semantics<parallel>, #tpu.dimension_semantics<parallel>, #tpu.dimension_semantics<arbitrary>], iteration_bounds = array<i64: 2, 8, 7>, scalar_prefetch = 0 : i64, scratch_operands = 1 : i64, tpu.core_type = #tpu.core_type<tc>, window_params = [{transform_indices = @transform_0, window_bounds = array<i64: 1, 1, 64, 256>}, {pipeline_mode = #tpu.pipeline_mode<synchronous>, transform_indices = @transform_1, window_bounds = array<i64: 7, 256, 128>}, {transform_indices = @transform_2, window_bounds = array<i64: 1, 1, 64, 128>}, {transform_indices = @transform_3, window_bounds = array<i64: 1, 1, 8, 128>}, {transform_indices = @transform_4, window_bounds = array<i64: 1, 1, 8, 128>}]} {
    %c0_i32 = arith.constant 0 : i32
    %0 = arith.cmpi eq, %arg2, %c0_i32 : i32
    %1 = arith.extui %0 : i1 to i32
    %c0_i32_0 = arith.constant 0 : i32
    %2 = arith.cmpi ne, %1, %c0_i32_0 : i32
    scf.if %2 {
      %cst_11 = arith.constant 0.000000e+00 : f32
      %15 = vector.broadcast %cst_11 : f32 to vector<64x128xf32>
      %c0_12 = arith.constant 0 : index
      %c0_13 = arith.constant 0 : index
      %16 = vector.load %arg8[%c0_12, %c0_13] : memref<64x128xf32, #tpu.memory_space<vmem>>, vector<64x128xf32>
      tpu.vector_store %arg8[%c0_12, %c0_13], %15 {strides = array<i32>} : memref<64x128xf32, #tpu.memory_space<vmem>>, vector<64x128xf32>,
    } else {
    }
    %c0 = arith.constant 0 : index
    %c0_1 = arith.constant 0 : index
    %3 = vector.load %arg8[%c0, %c0_1] : memref<64x128xf32, #tpu.memory_space<vmem>>, vector<64x128xf32>
    %c0_2 = arith.constant 0 : index
    %c0_3 = arith.constant 0 : index
    %c0_4 = arith.constant 0 : index
    %c0_5 = arith.constant 0 : index
    %4 = vector.load %arg3[%c0_2, %c0_3, %c0_4, %c0_5] : memref<1x1x64x256xbf16, #tpu.memory_space<vmem>>, vector<1x1x64x256xbf16>
    %5 = vector.shape_cast %4 : vector<1x1x64x256xbf16> to vector<64x256xbf16>
    %6 = arith.index_cast %arg2 : i32 to index
    %c0_6 = arith.constant 0 : index
    %c0_7 = arith.constant 0 : index
    %7 = vector.load %arg4[%6, %c0_6, %c0_7] : memref<7x256x128xbf16, #tpu.memory_space<vmem>>, vector<1x256x128xbf16>
    %8 = vector.shape_cast %7 : vector<1x256x128xbf16> to vector<256x128xbf16>
    %cst = arith.constant dense<0.000000e+00> : vector<64x128xf32>
    %9 = tpu.matmul %5, %8, %cst {dimension_numbers = #tpu.dot_dimension_numbers<[1], [0], [0], [1], [0, 0, 1, 1], [], []>} : vector<64x256xbf16>, vector<256x128xbf16>, vector<64x128xf32> -> vector<64x128xf32>
    %10 = arith.addf %3, %9 : vector<64x128xf32>
    %c0_8 = arith.constant 0 : index
    %c0_9 = arith.constant 0 : index
    %11 = vector.load %arg8[%c0_8, %c0_9] : memref<64x128xf32, #tpu.memory_space<vmem>>, vector<64x128xf32>
    tpu.vector_store %arg8[%c0_8, %c0_9], %10 {strides = array<i32>} : memref<64x128xf32, #tpu.memory_space<vmem>>, vector<64x128xf32>,
    %c6_i32 = arith.constant 6 : i32
    %12 = arith.cmpi eq, %arg2, %c6_i32 : i32
    %13 = arith.extui %12 : i1 to i32
    %c0_i32_10 = arith.constant 0 : i32
    %14 = arith.cmpi ne, %13, %c0_i32_10 : i32
    scf.if %14 {
      %c0_11 = arith.constant 0 : index
      %c0_12 = arith.constant 0 : index
      %15 = vector.load %arg8[%c0_11, %c0_12] : memref<64x128xf32, #tpu.memory_space<vmem>>, vector<64x128xf32>
      %16 = arith.truncf %15 : vector<64x128xf32> to vector<64x128xbf16>
      %c0_13 = arith.constant 0 : index
      %c0_14 = arith.constant 0 : index
      %c0_15 = arith.constant 0 : index
      %c0_16 = arith.constant 0 : index
      %17 = vector.load %arg5[%c0_13, %c0_14, %c0_15, %c0_16] : memref<1x1x64x128xbf16, #tpu.memory_space<vmem>>, vector<1x1x64x128xbf16>
      %18 = vector.shape_cast %17 : vector<1x1x64x128xbf16> to vector<64x128xbf16>
      %19 = vector.shape_cast %16 : vector<64x128xbf16> to vector<1x1x64x128xbf16>
      tpu.vector_store %arg5[%c0_13, %c0_14, %c0_15, %c0_16], %19 {strides = array<i32>} : memref<1x1x64x128xbf16, #tpu.memory_space<vmem>>, vector<1x1x64x128xbf16>,
      %cst_17 = arith.constant 1.000000e+00 : f32
      %20 = vector.broadcast %cst_17 : f32 to vector<8x64xf32>
      %cst_18 = arith.constant dense<0.000000e+00> : vector<8x128xf32>
      %21 = tpu.matmul %20, %15, %cst_18 {dimension_numbers = #tpu.dot_dimension_numbers<[1], [0], [0], [1], [0, 0, 1, 1], [], []>} : vector<8x64xf32>, vector<64x128xf32>, vector<8x128xf32> -> vector<8x128xf32>
      %c0_19 = arith.constant 0 : index
      %c0_20 = arith.constant 0 : index
      %c0_21 = arith.constant 0 : index
      %c0_22 = arith.constant 0 : index
      %22 = vector.load %arg6[%c0_19, %c0_20, %c0_21, %c0_22] : memref<1x1x8x128xf32, #tpu.memory_space<vmem>>, vector<1x1x8x128xf32>
      %23 = vector.shape_cast %22 : vector<1x1x8x128xf32> to vector<8x128xf32>
      %24 = vector.shape_cast %21 : vector<8x128xf32> to vector<1x1x8x128xf32>
      tpu.vector_store %arg6[%c0_19, %c0_20, %c0_21, %c0_22], %24 {strides = array<i32>} : memref<1x1x8x128xf32, #tpu.memory_space<vmem>>, vector<1x1x8x128xf32>,
      %25 = arith.mulf %15, %15 : vector<64x128xf32>
      %cst_23 = arith.constant dense<0.000000e+00> : vector<8x128xf32>
      %26 = tpu.matmul %20, %25, %cst_23 {dimension_numbers = #tpu.dot_dimension_numbers<[1], [0], [0], [1], [0, 0, 1, 1], [], []>} : vector<8x64xf32>, vector<64x128xf32>, vector<8x128xf32> -> vector<8x128xf32>
      %c0_24 = arith.constant 0 : index
      %c0_25 = arith.constant 0 : index
      %c0_26 = arith.constant 0 : index
      %c0_27 = arith.constant 0 : index
      %27 = vector.load %arg7[%c0_24, %c0_25, %c0_26, %c0_27] : memref<1x1x8x128xf32, #tpu.memory_space<vmem>>, vector<1x1x8x128xf32>
      %28 = vector.shape_cast %27 : vector<1x1x8x128xf32> to vector<8x128xf32>
      %29 = vector.shape_cast %26 : vector<8x128xf32> to vector<1x1x8x128xf32>
      tpu.vector_store %arg7[%c0_24, %c0_25, %c0_26, %c0_27], %29 {strides = array<i32>} : memref<1x1x8x128xf32, #tpu.memory_space<vmem>>, vector<1x1x8x128xf32>,
    } else {
    }
    return
  }
  func.func @transform_0(%arg0: i32, %arg1: i32, %arg2: i32) -> (i32, i32, i32, i32) {
    %c1_i32 = arith.constant 1 : i32
    %0 = arith.muli %arg1, %c1_i32 : i32
    %1 = arith.addi %0, %arg2 : i32
    %c0_i32 = arith.constant 0 : i32
    %c0_i32_0 = arith.constant 0 : i32
    %c0_i32_1 = arith.constant 0 : i32
    return %arg0, %1, %c0_i32, %c0_i32_0 : i32, i32, i32, i32
  }
  func.func @transform_1(%arg0: i32, %arg1: i32, %arg2: i32) -> (i32, i32, i32) {
    %c0_i32 = arith.constant 0 : i32
    %c0_i32_0 = arith.constant 0 : i32
    %c0_i32_1 = arith.constant 0 : i32
    %c0_i32_2 = arith.constant 0 : i32
    return %c0_i32, %c0_i32_0, %c0_i32_1 : i32, i32, i32
  }
  func.func @transform_2(%arg0: i32, %arg1: i32, %arg2: i32) -> (i32, i32, i32, i32) {
    %c0_i32 = arith.constant 0 : i32
    %c0_i32_0 = arith.constant 0 : i32
    %c0_i32_1 = arith.constant 0 : i32
    return %arg0, %arg1, %c0_i32, %c0_i32_0 : i32, i32, i32, i32
  }
  func.func @transform_3(%arg0: i32, %arg1: i32, %arg2: i32) -> (i32, i32, i32, i32) {
    %c0_i32 = arith.constant 0 : i32
    %c0_i32_0 = arith.constant 0 : i32
    %c0_i32_1 = arith.constant 0 : i32
    return %arg0, %arg1, %c0_i32, %c0_i32_0 : i32, i32, i32, i32
  }
  func.func @transform_4(%arg0: i32, %arg1: i32, %arg2: i32) -> (i32, i32, i32, i32) {
    %c0_i32 = arith.constant 0 : i32
    %c0_i32_0 = arith.constant 0 : i32
    %c0_i32_1 = arith.constant 0 : i32
    return %arg0, %arg1, %c0_i32, %c0_i32_0 : i32, i32, i32, i32
  }
}

module attributes {stable_mosaic.version = 11 : i64} {
  func.func @kernel(%arg0: i32, %arg1: memref<1x64x128xbf16, #tpu.memory_space<vmem>>, %arg2: memref<1x128xf32, #tpu.memory_space<vmem>>, %arg3: memref<1x128xf32, #tpu.memory_space<vmem>>, %arg4: memref<1x64x128xbf16, #tpu.memory_space<vmem>>) attributes {dimension_semantics = [#tpu.dimension_semantics<parallel>], iteration_bounds = array<i64: 16>, scalar_prefetch = 0 : i64, scratch_operands = 0 : i64, tpu.core_type = #tpu.core_type<tc>, window_params = [{transform_indices = @transform_0, window_bounds = array<i64: 1, 64, 128>}, {pipeline_mode = #tpu.pipeline_mode<synchronous>, transform_indices = @transform_1, window_bounds = array<i64: 1, 128>}, {pipeline_mode = #tpu.pipeline_mode<synchronous>, transform_indices = @transform_2, window_bounds = array<i64: 1, 128>}, {transform_indices = @transform_3, window_bounds = array<i64: 1, 64, 128>}]} {
    %c0 = arith.constant 0 : index
    %c0_0 = arith.constant 0 : index
    %c0_1 = arith.constant 0 : index
    %0 = vector.load %arg1[%c0, %c0_0, %c0_1] : memref<1x64x128xbf16, #tpu.memory_space<vmem>>, vector<1x64x128xbf16>
    %1 = arith.extf %0 : vector<1x64x128xbf16> to vector<1x64x128xf32>
    %c0_2 = arith.constant 0 : index
    %c0_3 = arith.constant 0 : index
    %2 = vector.load %arg2[%c0_2, %c0_3] : memref<1x128xf32, #tpu.memory_space<vmem>>, vector<1x128xf32>
    %3 = vector.shape_cast %2 : vector<1x128xf32> to vector<1x1x128xf32>
    %4 = vector.broadcast %3 : vector<1x1x128xf32> to vector<1x64x128xf32>
    %5 = arith.mulf %1, %4 : vector<1x64x128xf32>
    %c0_4 = arith.constant 0 : index
    %c0_5 = arith.constant 0 : index
    %6 = vector.load %arg3[%c0_4, %c0_5] : memref<1x128xf32, #tpu.memory_space<vmem>>, vector<1x128xf32>
    %7 = vector.shape_cast %6 : vector<1x128xf32> to vector<1x1x128xf32>
    %8 = vector.broadcast %7 : vector<1x1x128xf32> to vector<1x64x128xf32>
    %9 = arith.addf %5, %8 : vector<1x64x128xf32>
    %cst = arith.constant 0.000000e+00 : f32
    %10 = vector.broadcast %cst : f32 to vector<1x64x128xf32>
    %11 = arith.maximumf %9, %10 : vector<1x64x128xf32>
    %12 = arith.truncf %11 : vector<1x64x128xf32> to vector<1x64x128xbf16>
    %c0_6 = arith.constant 0 : index
    %c0_7 = arith.constant 0 : index
    %c0_8 = arith.constant 0 : index
    %13 = vector.load %arg4[%c0_6, %c0_7, %c0_8] : memref<1x64x128xbf16, #tpu.memory_space<vmem>>, vector<1x64x128xbf16>
    tpu.vector_store %arg4[%c0_6, %c0_7, %c0_8], %12 {strides = array<i32>} : memref<1x64x128xbf16, #tpu.memory_space<vmem>>, vector<1x64x128xbf16>,
    return
  }
  func.func @transform_0(%arg0: i32) -> (i32, i32, i32) {
    %c0_i32 = arith.constant 0 : i32
    %c0_i32_0 = arith.constant 0 : i32
    %c0_i32_1 = arith.constant 0 : i32
    return %arg0, %c0_i32, %c0_i32_0 : i32, i32, i32
  }
  func.func @transform_1(%arg0: i32) -> (i32, i32) {
    %c0_i32 = arith.constant 0 : i32
    %c0_i32_0 = arith.constant 0 : i32
    %c0_i32_1 = arith.constant 0 : i32
    return %c0_i32, %c0_i32_0 : i32, i32
  }
  func.func @transform_2(%arg0: i32) -> (i32, i32) {
    %c0_i32 = arith.constant 0 : i32
    %c0_i32_0 = arith.constant 0 : i32
    %c0_i32_1 = arith.constant 0 : i32
    return %c0_i32, %c0_i32_0 : i32, i32
  }
  func.func @transform_3(%arg0: i32) -> (i32, i32, i32) {
    %c0_i32 = arith.constant 0 : i32
    %c0_i32_0 = arith.constant 0 : i32
    %c0_i32_1 = arith.constant 0 : i32
    return %arg0, %c0_i32, %c0_i32_0 : i32, i32, i32
  }
}

</mosaic_0001>

<llo_original>
// kernel: conv3d_bn.3
$region0: #{conv3d_bn.3}
  #allocation0 [shape = 'u32[]', space=smem, size = 0x4, offset = 0x4, fixed_abs, tag = 'smem constant byte address 0x4 - core index']
  #allocation1 [shape = 'u32[144,128]{1,0:T(1,128)}', space=vmem, size = 0x12000, scoped, tag = 'internal scratch']
  %s0 = inlined_call_operand.vmem [shape: bf16[16,64,128], index: 0, kind: input, shape index: {}]
  %s1 = inlined_call_operand.vmem [shape: f32[1,128], index: 1, kind: input, shape index: {}]
  %s2 = inlined_call_operand.vmem [shape: f32[1,128], index: 2, kind: input, shape index: {}]
  %s3 = inlined_call_operand.hbm [shape: bf16[16,64,128], index: 3, kind: output, shape index: {}]
  %s4 = sld [smem:[#allocation0]]
  $region45: #{conv3d_bn.3} parent=0
    _
  %s6 = ssub.s32 1, %s4
  %s7 = scalar_select 0, %s6, %s4
  $region1: #{conv3d_bn.3} parent=0
    #allocation2 [shape = 'u8[32768]{0}', space=vmem, size = 0x8000, scoped, tag = 'output window, operand 0']
    #allocation3 [shape = 's32[2]{0}', space=sflag, size = 0x8, scoped, tag = 'scoped memory for conv3d_bn.3']
    %8 = vsyncpa [#allocation3], 0
    %s9 = scalar_lea.sflag [#allocation3], 1
    %10 = vsyncpa %s9, 0
    loop: start=0, step=1, limit=18
    $region2: #{conv3d_bn.3} parent=1 // loop_pre_header
      _
    $region3: #{conv3d_bn.3} parent=1 // loop_header
      %s12 = sphi 0, %s16
      %p13 = scmp.ge.s32.totalorder %s12, 18
      %s22 = sphi 0, %s24
      %s25 = sphi 0, %s22
      %s26 = sphi 0, %s25
      %s42 = sphi 0, %s26
      %s46 = sphi 0, %s46
      %s48 = sphi 0, %s46
      %s49 = sphi 0, %s48
      %s63 = sphi 0, %s49
      %s67 = sphi 0, %s67
      %s69 = sphi 0, %s67
      %s70 = sphi 0, %s69
      %s84 = sphi 0, %s70
      %s90 = sphi 0, %s92
      %s93 = sphi 0, %s90
      %s94 = sphi 0, %s93
      %s110 = sphi 0, %s94
    $region4: #{conv3d_bn.3} parent=1 // loop_header_branch
      %15 = sbr.rel (%p13) target = $region8
    $region5: #{conv3d_bn.3} parent=1 // loop_body
      %s17 = ssub.s32 %s12, 1
      %s18 = ssub.s32 %s12, 2
      %s19 = sadd.s32 %s12, 1
      %s20 = ssub.s32 %s12, %s19
      %p21 = scmp.eq.s32.totalorder %s20, 0
      %s23 = sadd.s32 %s22, 1
      %s24 = scalar_select %p21, %s22, %s23
      %p27 = pneg %p21
      %p28 = scmp.eq.s32.totalorder %s12, 15
      %p29 = por %p27, %p28
      %p30 = scmp.ne.s32.totalorder %s22, %s25
      %p31 = scmp.eq.s32.totalorder %s12, 0
      %p32 = por %p30, %p31
      %p33 = scmp.ne.s32.totalorder %s22, %s25
      %p34 = scmp.eq.s32.totalorder %s17, 15
      %p35 = por %p33, %p34
      %p36 = scmp.ne.s32.totalorder %s25, %s26
      %p37 = scmp.eq.s32.totalorder %s17, 0
      %p38 = por %p36, %p37
      %p39 = scmp.ne.s32.totalorder %s25, %s26
      %p40 = scmp.eq.s32.totalorder %s18, 15
      %p41 = por %p39, %p40
      %p43 = scmp.ne.s32.totalorder %s26, %s42
      %p44 = scmp.eq.s32.totalorder %s18, 0
      %p45 = por %p43, %p44
      %s47 = sadd.s32 %s46, 1
      %p50 = scmp.eq.s32.totalorder %s12, 15
      %p51 = scmp.ne.s32.totalorder %s46, %s48
      %p52 = scmp.eq.s32.totalorder %s12, 0
      %p53 = por %p51, %p52
      %p54 = scmp.ne.s32.totalorder %s46, %s48
      %p55 = scmp.eq.s32.totalorder %s17, 15
      %p56 = por %p54, %p55
      %p57 = scmp.ne.s32.totalorder %s48, %s49
      %p58 = scmp.eq.s32.totalorder %s17, 0
      %p59 = por %p57, %p58
      %p60 = scmp.ne.s32.totalorder %s48, %s49
      %p61 = scmp.eq.s32.totalorder %s18, 15
      %p62 = por %p60, %p61
      %p64 = scmp.ne.s32.totalorder %s49, %s63
      %p65 = scmp.eq.s32.totalorder %s18, 0
      %p66 = por %p64, %p65
      %s68 = sadd.s32 %s67, 1
      %p71 = scmp.eq.s32.totalorder %s12, 15
      %p72 = scmp.ne.s32.totalorder %s67, %s69
      %p73 = scmp.eq.s32.totalorder %s12, 0
      %p74 = por %p72, %p73
      %p75 = scmp.ne.s32.totalorder %s67, %s69
      %p76 = scmp.eq.s32.totalorder %s17, 15
      %p77 = por %p75, %p76
      %p78 = scmp.ne.s32.totalorder %s69, %s70
      %p79 = scmp.eq.s32.totalorder %s17, 0
      %p80 = por %p78, %p79
      %p81 = scmp.ne.s32.totalorder %s69, %s70
      %p82 = scmp.eq.s32.totalorder %s18, 15
      %p83 = por %p81, %p82
      %p85 = scmp.ne.s32.totalorder %s70, %s84
      %p86 = scmp.eq.s32.totalorder %s18, 0
      %p87 = por %p85, %p86
      %s88 = ssub.s32 %s12, %s19
      %p89 = scmp.eq.s32.totalorder %s88, 0
      %s91 = sadd.s32 %s90, 1
      %s92 = scalar_select %p89, %s90, %s91
      %p95 = pneg %p89
      %p96 = scmp.eq.s32.totalorder %s12, 15
      %p97 = por %p95, %p96
      %p98 = scmp.ne.s32.totalorder %s90, %s93
      %p99 = scmp.eq.s32.totalorder %s12, 0
      %p100 = por %p98, %p99
      %p101 = scmp.ne.s32.totalorder %s90, %s93
      %p102 = scmp.eq.s32.totalorder %s17, 15
      %p103 = por %p101, %p102
      %p104 = scmp.ne.s32.totalorder %s93, %s94
      %p105 = scmp.eq.s32.totalorder %s17, 0
      %p106 = por %p104, %p105
      %p107 = scmp.ne.s32.totalorder %s93, %s94
      %p108 = scmp.eq.s32.totalorder %s18, 15
      %p109 = por %p107, %p108
      %p111 = scmp.ne.s32.totalorder %s94, %s110
      %p112 = scmp.eq.s32.totalorder %s18, 0
      %p113 = por %p111, %p112
      %p114 = scmp.le.s32.totalorder 1, %s12
      %p115 = scmp.lt.s32.totalorder %s12, 17
      %p116 = pnand %p114, %p115
      %p117 = pneg %p116
      // Predicated region
      $region9: #{conv3d_bn.3} parent=5 // pred_check
        _
      $region10: #{conv3d_bn.3} parent=5 // pred_check_branch
        %119 = sbr.rel (%p116) target = $region12
      $region11: #{conv3d_bn.3} parent=5 // pred_region
        %s120 = ssub.s32 %s12, 1
        // Predicated region
        $region13: #{conv3d_bn.3} parent=11 // pred_check
          %p121 = pneg %p59
        $region14: #{conv3d_bn.3} parent=11 // pred_check_branch
          %123 = sbr.rel (%p121) target = $region16
        $region15: #{conv3d_bn.3} parent=11 // pred_region
          _
        $region16: #{conv3d_bn.3} parent=11 // pred_fallthru
          _
        // Predicated region
        $region17: #{conv3d_bn.3} parent=11 // pred_check
          %p124 = pneg %p80
        $region18: #{conv3d_bn.3} parent=11 // pred_check_branch
          %126 = sbr.rel (%p124) target = $region20
        $region19: #{conv3d_bn.3} parent=11 // pred_region
          _
        $region20: #{conv3d_bn.3} parent=11 // pred_fallthru
          _
      $region12: #{conv3d_bn.3} parent=5 // pred_fallthru
        _
      %p127 = scmp.lt.s32.totalorder %s12, 16
      // Predicated region
      $region21: #{conv3d_bn.3} parent=5 // pred_check
        %p128 = pneg %p127
      $region22: #{conv3d_bn.3} parent=5 // pred_check_branch
        %130 = sbr.rel (%p128) target = $region24
      $region23: #{conv3d_bn.3} parent=5 // pred_region
        // Predicated region
        $region25: #{conv3d_bn.3} parent=23 // pred_check
          %p131 = pneg %p32
        $region26: #{conv3d_bn.3} parent=23 // pred_check_branch
          %133 = sbr.rel (%p131) target = $region28
        $region27: #{conv3d_bn.3} parent=23 // pred_region
          %p134 = scmp.lt.s32.totalorder %s12, 15
          %s135 = scalar_select %p134, %s12, 15
          %s136 = smul.addr %s135, 8
          %s137 = smul.addr %s136, 4
          %s138 = scalar_lea.vmem %s0, %s137
        $region28: #{conv3d_bn.3} parent=23 // pred_fallthru
          _
      $region24: #{conv3d_bn.3} parent=5 // pred_fallthru
        _
      %p139 = scmp.le.s32.totalorder 1, %s12
      %p140 = scmp.lt.s32.totalorder %s12, 17
      %p141 = pnand %p139, %p140
      %p142 = pneg %p141
      // Predicated region
      $region29: #{conv3d_bn.3} parent=5 // pred_check
        _
      $region30: #{conv3d_bn.3} parent=5 // pred_check_branch
        %144 = sbr.rel (%p141) target = $region32
      $region31: #{conv3d_bn.3} parent=5 // pred_region
        %s145 = ssub.s32 %s12, 1
        %p146 = scmp.lt.s32.totalorder %s17, 15
        %s147 = scalar_select %p146, %s17, 15
        %s148 = smul.addr %s147, 8
        %s149 = smul.addr %s148, 4
        %s150 = scalar_lea.vmem %s0, %s149
        %p151 = pneg %p38
        %p152 = pneg %p35
        %p153 = pneg %p59
        %p154 = pneg %p56
        %p155 = pneg %p80
        %p156 = pneg %p77
        %p157 = pneg %p106
        %p158 = pneg %p103
        %s159 = sand.u32 %s93, 1
        %s160 = scalar_lea.sflag [#allocation3], %s159
        %s161 = sand.u32 %s93, 1
        %s162 = smul.addr %s161, 32
        %s163 = scalar_lea.vmem [#allocation2], %s162
        %p164 = scmp.lt.s32.totalorder %s17, 15
        %s165 = scalar_select %p164, %s17, 15
        %s166 = smul.addr %s165, 8
        %s167 = smul.addr %s166, 4
        %s168 = scalar_lea.vmem %s0, %s167
        %v169 = vld [vmem:[%s168] sm:$0xf]
        %v170 = vld [vmem:[%s168 + $0x4] sm:$0xf]
        %v171 = vld [vmem:[%s168 + $0x8] sm:$0xf]
        %v172 = vld [vmem:[%s168 + $0xc] sm:$0xf]
        %v173 = vld [vmem:[%s168 + $0x10] sm:$0xf]
        %v174 = vld [vmem:[%s168 + $0x14] sm:$0xf]
        %v175 = vld [vmem:[%s168 + $0x18] sm:$0xf]
        %v176 = vld [vmem:[%s168 + $0x1c] sm:$0xf]
        %v177 = vunpack.c.l.bf16 %v169
        %v178 = vunpack.c.l.bf16 %v170
        %v179 = vunpack.c.l.bf16 %v171
        %v180 = vunpack.c.l.bf16 %v172
        %v181 = vunpack.c.l.bf16 %v173
        %v182 = vunpack.c.l.bf16 %v174
        %v183 = vunpack.c.l.bf16 %v175
        %v184 = vunpack.c.l.bf16 %v176
        %v185 = vld [vmem:[%s1] sm:$0x1]
        %v187 = vlaneseq
        %v188 = vshrl.u32 %v187, 7
        %v189 = vsub.s32 0, %v188
        %v190 = vrot.slane %v185, %v189
        %v192 = vmul.f32 %v177, %v190
        %v193 = vmul.f32 %v178, %v190
        %v194 = vmul.f32 %v179, %v190
        %v195 = vmul.f32 %v180, %v190
        %v196 = vmul.f32 %v181, %v190
        %v197 = vmul.f32 %v182, %v190
        %v198 = vmul.f32 %v183, %v190
        %v199 = vmul.f32 %v184, %v190
        %v200 = vld [vmem:[%s2] sm:$0x1]
        %v202 = vlaneseq
        %v203 = vshrl.u32 %v202, 7
        %v204 = vsub.s32 0, %v203
        %v205 = vrot.slane %v200, %v204
        %v207 = vadd.f32 %v192, %v205
        %v208 = vadd.f32 %v193, %v205
        %v209 = vadd.f32 %v194, %v205
        %v210 = vadd.f32 %v195, %v205
        %v211 = vadd.f32 %v196, %v205
        %v212 = vadd.f32 %v197, %v205
        %v213 = vadd.f32 %v198, %v205
        %v214 = vadd.f32 %v199, %v205
        %v215 = vmax.f32 %v207, 0.0
        %v216 = vmax.f32 %v208, 0.0
        %v217 = vmax.f32 %v209, 0.0
        %v218 = vmax.f32 %v210, 0.0
        %v219 = vmax.f32 %v211, 0.0
        %v220 = vmax.f32 %v212, 0.0
        %v221 = vmax.f32 %v213, 0.0
        %v222 = vmax.f32 %v214, 0.0
        %v223 = vpack.c.bf16 %v216, %v215
        %v224 = vpack.c.bf16 %v218, %v217
        %v225 = vpack.c.bf16 %v220, %v219
        %v226 = vpack.c.bf16 %v222, %v221
        %v231 = vunpack.c.l.b16 %v223
        %v232 = vunpack.c.h.b16 %v223
        %v233 = vunpack.c.l.b16 %v224
        %v234 = vunpack.c.h.b16 %v224
        %v235 = vunpack.c.l.b16 %v225
        %v236 = vunpack.c.h.b16 %v225
        %v237 = vunpack.c.l.b16 %v226
        %v238 = vunpack.c.h.b16 %v226
        %v239 = vpack.c.b16 %v231, %v231
        %v240 = vpack.c.b16 %v232, %v232
        %v241 = vpack.c.b16 %v233, %v233
        %v242 = vpack.c.b16 %v234, %v234
        %v243 = vpack.c.b16 %v235, %v235
        %v244 = vpack.c.b16 %v236, %v236
        %v245 = vpack.c.b16 %v237, %v237
        %v246 = vpack.c.b16 %v238, %v238
        %255 = vst [vmem:[%s163] sm:$0xf] %v239
        %256 = vst [vmem:[%s163 + $0x4] sm:$0xf] %v240
        %257 = vst [vmem:[%s163 + $0x8] sm:$0xf] %v241
        %258 = vst [vmem:[%s163 + $0xc] sm:$0xf] %v242
        %259 = vst [vmem:[%s163 + $0x10] sm:$0xf] %v243
        %260 = vst [vmem:[%s163 + $0x14] sm:$0xf] %v244
        %261 = vst [vmem:[%s163 + $0x18] sm:$0xf] %v245
        %262 = vst [vmem:[%s163 + $0x1c] sm:$0xf] %v246
        %s263 = sand.u32 %s93, 1
        %s264 = scalar_lea.sflag [#allocation3], %s263
        %s265 = sand.u32 %s93, 1
        %s266 = smul.addr %s265, 32
        %s267 = scalar_lea.vmem [#allocation2], %s266
        // Predicated region
        $region33: #{conv3d_bn.3} parent=31 // pred_check
          %p268 = pneg %p103
        $region34: #{conv3d_bn.3} parent=31 // pred_check_branch
          %270 = sbr.rel (%p268) target = $region36
        $region35: #{conv3d_bn.3} parent=31 // pred_region
          %s272 = ssub.s32 512, 512
          %273 = vsyncadd %s264, %s272
          %s274 = smul.addr %s17, 8
          %s275 = smul.addr %s274, 64
          %s276 = scalar_lea.hbm %s3, %s275
          %s277 = sshll.u32 %s267, 4
          %s278 = int_to_ptr.vmem [resolvable:$true] %s277
          %283 = dma.vmem_to_hbm [thread:$0]  %s278, 512, %s276, %s264, 64, 64, 4
        $region36: #{conv3d_bn.3} parent=31 // pred_fallthru
          _
      $region32: #{conv3d_bn.3} parent=5 // pred_fallthru
        _
      %p284 = scmp.le.s32.totalorder 2, %s12
      // Predicated region
      $region37: #{conv3d_bn.3} parent=5 // pred_check
        %p285 = pneg %p284
      $region38: #{conv3d_bn.3} parent=5 // pred_check_branch
        %287 = sbr.rel (%p285) target = $region40
      $region39: #{conv3d_bn.3} parent=5 // pred_region
        %s288 = ssub.s32 %s12, 2
        // Predicated region
        $region41: #{conv3d_bn.3} parent=39 // pred_check
          %p289 = pneg %p109
        $region42: #{conv3d_bn.3} parent=39 // pred_check_branch
          %291 = sbr.rel (%p289) target = $region44
        $region43: #{conv3d_bn.3} parent=39 // pred_region
          %s292 = sand.u32 %s94, 1
          %s293 = scalar_lea.sflag [#allocation3], %s292
          %s294 = sand.u32 %s94, 1
          %s295 = smul.addr %s294, 32
          %s296 = scalar_lea.vmem [#allocation2], %s295
          %297 = dma.done %s293, 512
        $region44: #{conv3d_bn.3} parent=39 // pred_fallthru
          _
      $region40: #{conv3d_bn.3} parent=5 // pred_fallthru
        _
    $region6: #{conv3d_bn.3} parent=1 // loop_footer
      %s16 = sadd.s32 1, %s12
    $region7: #{conv3d_bn.3} parent=1 // loop_footer_branch
      %11 = sbr.rel target = $region3
    $region8: #{conv3d_bn.3} parent=1 // loop_exit
      _
    %298 = vsyncpa [#allocation3], 1
    %s299 = scalar_lea.sflag [#allocation3], 1
    %300 = vsyncpa %s299, 1

// kernel: conv3d_bn.2
$region0: #{conv3d_bn.2}
  #allocation0 [shape = 'u32[]', space=smem, size = 0x4, offset = 0x4, fixed_abs, tag = 'smem constant byte address 0x4 - core index']
  #allocation1 [shape = 'u32[144,128]{1,0:T(1,128)}', space=vmem, size = 0x12000, scoped, tag = 'internal scratch']
  #allocation2 [shape = 'f32[64,128]{1,0:T(8,128)}', space=vmem, size = 0x8000, scoped, tag = 'scratch operand']
  %s0 = inlined_call_operand.vmem [shape: bf16[2,14,64,256], index: 0, kind: input, shape index: {}]
  %s1 = inlined_call_operand.vmem [shape: bf16[7,256,128], index: 1, kind: input, shape index: {}]
  %s2 = inlined_call_operand.vmem [shape: bf16[2,8,64,128], index: 2, kind: output, shape index: {0}]
  %s3 = inlined_call_operand.vmem [shape: f32[2,8,8,128], index: 3, kind: output, shape index: {1}]
  %s4 = inlined_call_operand.vmem [shape: f32[2,8,8,128], index: 4, kind: output, shape index: {2}]
  %5 = xla_tuple %s2, %s3, %s4
  %s6 = sld [smem:[#allocation0]]
  $region65: #{conv3d_bn.2} parent=0
    _
  %s8 = ssub.s32 1, %s6
  %s9 = scalar_select 0, %s8, %s6
  loop: start=0, step=1, limit=114
  $region2: #{conv3d_bn.2} parent=0 // loop_pre_header
    _
  $region3: #{conv3d_bn.2} parent=0 // loop_header
    %s11 = sphi 0, %s15
    %p12 = scmp.ge.s32.totalorder %s11, 114
    %s18 = sphi 0, %s37
    %s19 = sphi 0, %s33
    %s20 = sphi 0, %s29
    %s21 = sphi 0, %s18
    %s22 = sphi 0, %s19
    %s23 = sphi 0, %s20
    %s24 = sphi 0, %s21
    %s25 = sphi 0, %s22
    %s26 = sphi 0, %s23
    %s44 = sphi 0, %s46
    %s47 = sphi 0, %s44
    %s48 = sphi 0, %s47
    %s64 = sphi 0, %s48
    %s68 = sphi 0, %s68
    %s70 = sphi 0, %s68
    %s71 = sphi 0, %s70
    %s85 = sphi 0, %s71
    %s93 = sphi 0, %s95
    %s96 = sphi 0, %s93
    %s97 = sphi 0, %s96
    %s113 = sphi 0, %s97
    %s121 = sphi 0, %s123
    %s124 = sphi 0, %s121
    %s125 = sphi 0, %s124
    %s141 = sphi 0, %s125
    %s149 = sphi 0, %s151
    %s152 = sphi 0, %s149
    %s153 = sphi 0, %s152
    %s169 = sphi 0, %s153
  $region4: #{conv3d_bn.2} parent=0 // loop_header_branch
    %14 = sbr.rel (%p12) target = $region8
  $region5: #{conv3d_bn.2} parent=0 // loop_body
    %s16 = ssub.s32 %s11, 1
    %s17 = ssub.s32 %s11, 2
    %s27 = sadd.s32 1, %s20
    %p28 = scmp.ge.s32.totalorder %s27, 7
    %s29 = scalar_select %p28, 0, %s27
    %s30 = sadd.s32 1, %s19
    %s31 = scalar_select %p28, %s30, %s19
    %p32 = scmp.ge.s32.totalorder %s31, 8
    %s33 = scalar_select %p32, 0, %s31
    %s34 = sadd.s32 1, %s18
    %s35 = scalar_select %p32, %s34, %s18
    %p36 = scmp.ge.s32.totalorder %s35, 2
    %s37 = scalar_select %p36, 0, %s35
    %s38 = sadd.s32 %s19, %s20
    %s39 = sadd.s32 %s33, %s29
    %s40 = ssub.s32 %s18, %s37
    %s41 = ssub.s32 %s38, %s39
    %s42 = sor.u32 %s40, %s41
    %p43 = scmp.eq.s32.totalorder %s42, 0
    %s45 = sadd.s32 %s44, 1
    %s46 = scalar_select %p43, %s44, %s45
    %p49 = pneg %p43
    %p50 = scmp.eq.s32.totalorder %s11, 111
    %p51 = por %p49, %p50
    %p52 = scmp.ne.s32.totalorder %s44, %s47
    %p53 = scmp.eq.s32.totalorder %s11, 0
    %p54 = por %p52, %p53
    %p55 = scmp.ne.s32.totalorder %s44, %s47
    %p56 = scmp.eq.s32.totalorder %s16, 111
    %p57 = por %p55, %p56
    %p58 = scmp.ne.s32.totalorder %s47, %s48
    %p59 = scmp.eq.s32.totalorder %s16, 0
    %p60 = por %p58, %p59
    %p61 = scmp.ne.s32.totalorder %s47, %s48
    %p62 = scmp.eq.s32.totalorder %s17, 111
    %p63 = por %p61, %p62
    %p65 = scmp.ne.s32.totalorder %s48, %s64
    %p66 = scmp.eq.s32.totalorder %s17, 0
    %p67 = por %p65, %p66
    %s69 = sadd.s32 %s68, 1
    %p72 = scmp.eq.s32.totalorder %s11, 111
    %p73 = scmp.ne.s32.totalorder %s68, %s70
    %p74 = scmp.eq.s32.totalorder %s11, 0
    %p75 = por %p73, %p74
    %p76 = scmp.ne.s32.totalorder %s68, %s70
    %p77 = scmp.eq.s32.totalorder %s16, 111
    %p78 = por %p76, %p77
    %p79 = scmp.ne.s32.totalorder %s70, %s71
    %p80 = scmp.eq.s32.totalorder %s16, 0
    %p81 = por %p79, %p80
    %p82 = scmp.ne.s32.totalorder %s70, %s71
    %p83 = scmp.eq.s32.totalorder %s17, 111
    %p84 = por %p82, %p83
    %p86 = scmp.ne.s32.totalorder %s71, %s85
    %p87 = scmp.eq.s32.totalorder %s17, 0
    %p88 = por %p86, %p87
    %s89 = ssub.s32 %s18, %s37
    %s90 = ssub.s32 %s19, %s33
    %s91 = sor.u32 %s89, %s90
    %p92 = scmp.eq.s32.totalorder %s91, 0
    %s94 = sadd.s32 %s93, 1
    %s95 = scalar_select %p92, %s93, %s94
    %p98 = pneg %p92
    %p99 = scmp.eq.s32.totalorder %s11, 111
    %p100 = por %p98, %p99
    %p101 = scmp.ne.s32.totalorder %s93, %s96
    %p102 = scmp.eq.s32.totalorder %s11, 0
    %p103 = por %p101, %p102
    %p104 = scmp.ne.s32.totalorder %s93, %s96
    %p105 = scmp.eq.s32.totalorder %s16, 111
    %p106 = por %p104, %p105
    %p107 = scmp.ne.s32.totalorder %s96, %s97
    %p108 = scmp.eq.s32.totalorder %s16, 0
    %p109 = por %p107, %p108
    %p110 = scmp.ne.s32.totalorder %s96, %s97
    %p111 = scmp.eq.s32.totalorder %s17, 111
    %p112 = por %p110, %p111
    %p114 = scmp.ne.s32.totalorder %s97, %s113
    %p115 = scmp.eq.s32.totalorder %s17, 0
    %p116 = por %p114, %p115
    %s117 = ssub.s32 %s18, %s37
    %s118 = ssub.s32 %s19, %s33
    %s119 = sor.u32 %s117, %s118
    %p120 = scmp.eq.s32.totalorder %s119, 0
    %s122 = sadd.s32 %s121, 1
    %s123 = scalar_select %p120, %s121, %s122
    %p126 = pneg %p120
    %p127 = scmp.eq.s32.totalorder %s11, 111
    %p128 = por %p126, %p127
    %p129 = scmp.ne.s32.totalorder %s121, %s124
    %p130 = scmp.eq.s32.totalorder %s11, 0
    %p131 = por %p129, %p130
    %p132 = scmp.ne.s32.totalorder %s121, %s124
    %p133 = scmp.eq.s32.totalorder %s16, 111
    %p134 = por %p132, %p133
    %p135 = scmp.ne.s32.totalorder %s124, %s125
    %p136 = scmp.eq.s32.totalorder %s16, 0
    %p137 = por %p135, %p136
    %p138 = scmp.ne.s32.totalorder %s124, %s125
    %p139 = scmp.eq.s32.totalorder %s17, 111
    %p140 = por %p138, %p139
    %p142 = scmp.ne.s32.totalorder %s125, %s141
    %p143 = scmp.eq.s32.totalorder %s17, 0
    %p144 = por %p142, %p143
    %s145 = ssub.s32 %s18, %s37
    %s146 = ssub.s32 %s19, %s33
    %s147 = sor.u32 %s145, %s146
    %p148 = scmp.eq.s32.totalorder %s147, 0
    %s150 = sadd.s32 %s149, 1
    %s151 = scalar_select %p148, %s149, %s150
    %p154 = pneg %p148
    %p155 = scmp.eq.s32.totalorder %s11, 111
    %p156 = por %p154, %p155
    %p157 = scmp.ne.s32.totalorder %s149, %s152
    %p158 = scmp.eq.s32.totalorder %s11, 0
    %p159 = por %p157, %p158
    %p160 = scmp.ne.s32.totalorder %s149, %s152
    %p161 = scmp.eq.s32.totalorder %s16, 111
    %p162 = por %p160, %p161
    %p163 = scmp.ne.s32.totalorder %s152, %s153
    %p164 = scmp.eq.s32.totalorder %s16, 0
    %p165 = por %p163, %p164
    %p166 = scmp.ne.s32.totalorder %s152, %s153
    %p167 = scmp.eq.s32.totalorder %s17, 111
    %p168 = por %p166, %p167
    %p170 = scmp.ne.s32.totalorder %s153, %s169
    %p171 = scmp.eq.s32.totalorder %s17, 0
    %p172 = por %p170, %p171
    %p173 = scmp.le.s32.totalorder 1, %s11
    %p174 = scmp.lt.s32.totalorder %s11, 113
    %p175 = pnand %p173, %p174
    %p176 = pneg %p175
    // Predicated region
    $region9: #{conv3d_bn.2} parent=5 // pred_check
      _
    $region10: #{conv3d_bn.2} parent=5 // pred_check_branch
      %178 = sbr.rel (%p175) target = $region12
    $region11: #{conv3d_bn.2} parent=5 // pred_region
      %s179 = ssub.s32 %s11, 1
      // Predicated region
      $region13: #{conv3d_bn.2} parent=11 // pred_check
        %p180 = pneg %p81
      $region14: #{conv3d_bn.2} parent=11 // pred_check_branch
        %182 = sbr.rel (%p180) target = $region16
      $region15: #{conv3d_bn.2} parent=11 // pred_region
        _
      $region16: #{conv3d_bn.2} parent=11 // pred_fallthru
        _
    $region12: #{conv3d_bn.2} parent=5 // pred_fallthru
      _
    %p183 = scmp.lt.s32.totalorder %s11, 112
    // Predicated region
    $region17: #{conv3d_bn.2} parent=5 // pred_check
      %p184 = pneg %p183
    $region18: #{conv3d_bn.2} parent=5 // pred_check_branch
      %186 = sbr.rel (%p184) target = $region20
    $region19: #{conv3d_bn.2} parent=5 // pred_region
      // Predicated region
      $region21: #{conv3d_bn.2} parent=19 // pred_check
        %p187 = pneg %p54
      $region22: #{conv3d_bn.2} parent=19 // pred_check_branch
        %189 = sbr.rel (%p187) target = $region24
      $region23: #{conv3d_bn.2} parent=19 // pred_region
        %s190 = sadd.s32 %s19, %s20
        %p191 = scmp.lt.s32.totalorder %s18, 1
        %s192 = scalar_select %p191, %s18, 1
        %p193 = scmp.lt.s32.totalorder %s190, 13
        %s194 = scalar_select %p193, %s190, 13
        %s195 = smul.addr %s194, 16
        %s196 = smul.addr %s192, 224
        %s197 = sadd.s32 %s195, %s196
        %s198 = smul.addr %s197, 4
        %s199 = scalar_lea.vmem %s0, %s198
        %s200 = sadd.s32 %s19, %s20
      $region24: #{conv3d_bn.2} parent=19 // pred_fallthru
        _
    $region20: #{conv3d_bn.2} parent=5 // pred_fallthru
      _
    %p201 = scmp.le.s32.totalorder 1, %s11
    %p202 = scmp.lt.s32.totalorder %s11, 113
    %p203 = pnand %p201, %p202
    %p204 = pneg %p203
    // Predicated region
    $region25: #{conv3d_bn.2} parent=5 // pred_check
      _
    $region26: #{conv3d_bn.2} parent=5 // pred_check_branch
      %206 = sbr.rel (%p203) target = $region28
    $region27: #{conv3d_bn.2} parent=5 // pred_region
      %s207 = ssub.s32 %s11, 1
      %s208 = sadd.s32 %s22, %s23
      %p209 = scmp.lt.s32.totalorder %s21, 1
      %s210 = scalar_select %p209, %s21, 1
      %p211 = scmp.lt.s32.totalorder %s208, 13
      %s212 = scalar_select %p211, %s208, 13
      %s213 = smul.addr %s212, 16
      %s214 = smul.addr %s210, 224
      %s215 = sadd.s32 %s213, %s214
      %s216 = smul.addr %s215, 4
      %s217 = scalar_lea.vmem %s0, %s216
      %p218 = pneg %p60
      %p219 = pneg %p57
      %p220 = pneg %p81
      %p221 = pneg %p78
      %p222 = pneg %p109
      %p223 = pneg %p106
      %p224 = scmp.lt.s32.totalorder %s21, 1
      %s225 = scalar_select %p224, %s21, 1
      %p226 = scmp.lt.s32.totalorder %s22, 7
      %s227 = scalar_select %p226, %s22, 7
      %s228 = smul.addr %s227, 8
      %s229 = smul.addr %s225, 64
      %s230 = sadd.s32 %s228, %s229
      %s231 = smul.addr %s230, 4
      %s232 = scalar_lea.vmem %s2, %s231
      %p233 = pneg %p137
      %p234 = pneg %p134
      %p235 = scmp.lt.s32.totalorder %s21, 1
      %s236 = scalar_select %p235, %s21, 1
      %p237 = scmp.lt.s32.totalorder %s22, 7
      %s238 = scalar_select %p237, %s22, 7
      %s239 = smul.addr %s236, 8
      %s240 = sadd.s32 %s238, %s239
      %s241 = smul.addr %s240, 8
      %s242 = scalar_lea.vmem %s3, %s241
      %p243 = pneg %p165
      %p244 = pneg %p162
      %p245 = scmp.lt.s32.totalorder %s21, 1
      %s246 = scalar_select %p245, %s21, 1
      %p247 = scmp.lt.s32.totalorder %s22, 7
      %s248 = scalar_select %p247, %s22, 7
      %s249 = smul.addr %s246, 8
      %s250 = sadd.s32 %s248, %s249
      %s251 = smul.addr %s250, 8
      %s252 = scalar_lea.vmem %s4, %s251
      %s253 = sadd.s32 %s22, %s23
      %p254 = scmp.lt.s32.totalorder %s21, 1
      %s255 = scalar_select %p254, %s21, 1
      %p256 = scmp.lt.s32.totalorder %s253, 13
      %s257 = scalar_select %p256, %s253, 13
      %s258 = smul.addr %s257, 16
      %s259 = smul.addr %s255, 224
      %s260 = sadd.s32 %s258, %s259
      %s261 = smul.addr %s260, 4
      %s262 = scalar_lea.vmem %s0, %s261
      %s263 = sadd.s32 %s22, %s23
      %p264 = scmp.lt.s32.totalorder %s21, 1
      %s265 = scalar_select %p264, %s21, 1
      %p266 = scmp.lt.s32.totalorder %s22, 7
      %s267 = scalar_select %p266, %s22, 7
      %s268 = smul.addr %s267, 8
      %s269 = smul.addr %s265, 64
      %s270 = sadd.s32 %s268, %s269
      %s271 = smul.addr %s270, 4
      %s272 = scalar_lea.vmem %s2, %s271
      %p273 = scmp.lt.s32.totalorder %s21, 1
      %s274 = scalar_select %p273, %s21, 1
      %p275 = scmp.lt.s32.totalorder %s22, 7
      %s276 = scalar_select %p275, %s22, 7
      %s277 = smul.addr %s274, 8
      %s278 = sadd.s32 %s276, %s277
      %s279 = smul.addr %s278, 8
      %s280 = scalar_lea.vmem %s3, %s279
      %p281 = scmp.lt.s32.totalorder %s21, 1
      %s282 = scalar_select %p281, %s21, 1
      %p283 = scmp.lt.s32.totalorder %s22, 7
      %s284 = scalar_select %p283, %s22, 7
      %s285 = smul.addr %s282, 8
      %s286 = sadd.s32 %s284, %s285
      %s287 = smul.addr %s286, 8
      %s288 = scalar_lea.vmem %s4, %s287
      %p290 = scmp.eq.s32.totalorder %s23, 0
      // Predicated region
      $region29: #{conv3d_bn.2} parent=27 // pred_check
        %p291 = pneg %p290
      $region30: #{conv3d_bn.2} parent=27 // pred_check_branch
        %293 = sbr.rel (%p291) target = $region32
      $region31: #{conv3d_bn.2} parent=27 // pred_region
        %294 = vst [vmem:[#allocation2] sm:$0xff] 0.0
        %295 = vst [vmem:[#allocation2 + $0x8] sm:$0xff] 0.0
        %296 = vst [vmem:[#allocation2 + $0x10] sm:$0xff] 0.0
        %297 = vst [vmem:[#allocation2 + $0x18] sm:$0xff] 0.0
        %298 = vst [vmem:[#allocation2 + $0x20] sm:$0xff] 0.0
        %299 = vst [vmem:[#allocation2 + $0x28] sm:$0xff] 0.0
        %300 = vst [vmem:[#allocation2 + $0x30] sm:$0xff] 0.0
        %301 = vst [vmem:[#allocation2 + $0x38] sm:$0xff] 0.0
      $region32: #{conv3d_bn.2} parent=27 // pred_fallthru
        _
      %v302 = vld [vmem:[#allocation2] sm:$0xff]
      %v303 = vld [vmem:[#allocation2 + $0x8] sm:$0xff]
      %v304 = vld [vmem:[#allocation2 + $0x10] sm:$0xff]
      %v305 = vld [vmem:[#allocation2 + $0x18] sm:$0xff]
      %v306 = vld [vmem:[#allocation2 + $0x20] sm:$0xff]
      %v307 = vld [vmem:[#allocation2 + $0x28] sm:$0xff]
      %v308 = vld [vmem:[#allocation2 + $0x30] sm:$0xff]
      %v309 = vld [vmem:[#allocation2 + $0x38] sm:$0xff]
      %v310 = vld [vmem:[%s262] sm:$0xff]
      %v311 = vld [vmem:[%s262 + $0x8] sm:$0xff]
      %v312 = vld [vmem:[%s262 + $0x10] sm:$0xff]
      %v313 = vld [vmem:[%s262 + $0x18] sm:$0xff]
      %v314 = vld [vmem:[%s262 + $0x20] sm:$0xff]
      %v315 = vld [vmem:[%s262 + $0x28] sm:$0xff]
      %v316 = vld [vmem:[%s262 + $0x30] sm:$0xff]
      %v317 = vld [vmem:[%s262 + $0x38] sm:$0xff]
      %s318 = smul.u32 %s23, 32
      %s319 = smul.addr %s318, 4
      %s320 = scalar_lea.vmem %s1, %s319
      %v321 = vld [vmem:[%s320] sm:$0xf]
      %v322 = vld [vmem:[%s320 + $0x4] sm:$0xf]
      %v323 = vld [vmem:[%s320 + $0x8] sm:$0xf]
      %v324 = vld [vmem:[%s320 + $0xc] sm:$0xf]
      %v325 = vld [vmem:[%s320 + $0x10] sm:$0xf]
      %v326 = vld [vmem:[%s320 + $0x14] sm:$0xf]
      %v327 = vld [vmem:[%s320 + $0x18] sm:$0xf]
      %v328 = vld [vmem:[%s320 + $0x1c] sm:$0xf]
      %v329 = vld [vmem:[%s320 + $0x20] sm:$0xf]
      %v330 = vld [vmem:[%s320 + $0x24] sm:$0xf]
      %v331 = vld [vmem:[%s320 + $0x28] sm:$0xf]
      %v332 = vld [vmem:[%s320 + $0x2c] sm:$0xf]
      %v333 = vld [vmem:[%s320 + $0x30] sm:$0xf]
      %v334 = vld [vmem:[%s320 + $0x34] sm:$0xf]
      %v335 = vld [vmem:[%s320 + $0x38] sm:$0xf]
      %v336 = vld [vmem:[%s320 + $0x3c] sm:$0xf]
      %v337 = vld [vmem:[%s320 + $0x40] sm:$0xf]
      %v338 = vld [vmem:[%s320 + $0x44] sm:$0xf]
      %v339 = vld [vmem:[%s320 + $0x48] sm:$0xf]
      %v340 = vld [vmem:[%s320 + $0x4c] sm:$0xf]
      %v341 = vld [vmem:[%s320 + $0x50] sm:$0xf]
      %v342 = vld [vmem:[%s320 + $0x54] sm:$0xf]
      %v343 = vld [vmem:[%s320 + $0x58] sm:$0xf]
      %v344 = vld [vmem:[%s320 + $0x5c] sm:$0xf]
      %v345 = vld [vmem:[%s320 + $0x60] sm:$0xf]
      %v346 = vld [vmem:[%s320 + $0x64] sm:$0xf]
      %v347 = vld [vmem:[%s320 + $0x68] sm:$0xf]
      %v348 = vld [vmem:[%s320 + $0x6c] sm:$0xf]
      %v349 = vld [vmem:[%s320 + $0x70] sm:$0xf]
      %v350 = vld [vmem:[%s320 + $0x74] sm:$0xf]
      %v351 = vld [vmem:[%s320 + $0x78] sm:$0xf]
      %v352 = vld [vmem:[%s320 + $0x7c] sm:$0xf]
      %v361 = vunpack.c.l.b16 %v310
      %v362 = vunpack.c.h.b16 %v310
      %v363 = vunpack.c.l.b16 %v311
      %v364 = vunpack.c.h.b16 %v311
      %v365 = vunpack.c.l.b16 %v312
      %v366 = vunpack.c.h.b16 %v312
      %v367 = vunpack.c.l.b16 %v313
      %v368 = vunpack.c.h.b16 %v313
      %v369 = vunpack.c.l.b16 %v314
      %v370 = vunpack.c.h.b16 %v314
      %v371 = vunpack.c.l.b16 %v315
      %v372 = vunpack.c.h.b16 %v315
      %v373 = vunpack.c.l.b16 %v316
      %v374 = vunpack.c.h.b16 %v316
      %v375 = vunpack.c.l.b16 %v317
      %v376 = vunpack.c.h.b16 %v317
      %v377 = vpack.c.b16 %v363, %v361
      %v378 = vpack.c.b16 %v364, %v362
      %v379 = vpack.c.b16 %v367, %v365
      %v380 = vpack.c.b16 %v368, %v366
      %v381 = vpack.c.b16 %v371, %v369
      %v382 = vpack.c.b16 %v372, %v370
      %v383 = vpack.c.b16 %v375, %v373
      %v384 = vpack.c.b16 %v376, %v374
      %v425 = vunpack.c.l.b16 %v321
      %v426 = vunpack.c.l.b16 %v322
      %v427 = vunpack.c.l.b16 %v323
      %v428 = vunpack.c.l.b16 %v324
      %v429 = vunpack.c.l.b16 %v325
      %v430 = vunpack.c.l.b16 %v326
      %v431 = vunpack.c.l.b16 %v327
      %v432 = vunpack.c.l.b16 %v328
      %v433 = vunpack.c.l.b16 %v329
      %v434 = vunpack.c.l.b16 %v330
      %v435 = vunpack.c.l.b16 %v331
      %v436 = vunpack.c.l.b16 %v332
      %v437 = vunpack.c.l.b16 %v333
      %v438 = vunpack.c.l.b16 %v334
      %v439 = vunpack.c.l.b16 %v335
      %v440 = vunpack.c.l.b16 %v336
      %v441 = vunpack.c.l.b16 %v337
      %v442 = vunpack.c.l.b16 %v338
      %v443 = vunpack.c.l.b16 %v339
      %v444 = vunpack.c.l.b16 %v340
      %v445 = vunpack.c.l.b16 %v341
      %v446 = vunpack.c.l.b16 %v342
      %v447 = vunpack.c.l.b16 %v343
      %v448 = vunpack.c.l.b16 %v344
      %v449 = vunpack.c.l.b16 %v345
      %v450 = vunpack.c.l.b16 %v346
      %v451 = vunpack.c.l.b16 %v347
      %v452 = vunpack.c.l.b16 %v348
      %v453 = vunpack.c.l.b16 %v349
      %v454 = vunpack.c.l.b16 %v350
      %v455 = vunpack.c.l.b16 %v351
      %v456 = vunpack.c.l.b16 %v352
      %v457 = vpack.c.b16 %v426, %v425
      %v458 = vpack.c.b16 %v428, %v427
      %v459 = vpack.c.b16 %v430, %v429
      %v460 = vpack.c.b16 %v432, %v431
      %v461 = vpack.c.b16 %v434, %v433
      %v462 = vpack.c.b16 %v436, %v435
      %v463 = vpack.c.b16 %v438, %v437
      %v464 = vpack.c.b16 %v440, %v439
      %v465 = vpack.c.b16 %v442, %v441
      %v466 = vpack.c.b16 %v444, %v443
      %v467 = vpack.c.b16 %v446, %v445
      %v468 = vpack.c.b16 %v448, %v447
      %v469 = vpack.c.b16 %v450, %v449
      %v470 = vpack.c.b16 %v452, %v451
      %v471 = vpack.c.b16 %v454, %v453
      %v472 = vpack.c.b16 %v456, %v455
      %489 = vmatprep.subr.bf16.mxu0 0
      %490 = vmatpush1.bf16.msra.mxu0 %v457
      %491 = vmatprep.subr.bf16.mxu0 0
      %492 = vmatpush1.bf16.msra.mxu0 %v458
      %493 = vmatprep.subr.bf16.mxu0 0
      %494 = vmatpush1.bf16.msra.mxu0 %v459
      %495 = vmatprep.subr.bf16.mxu0 0
      %496 = vmatpush1.bf16.msra.mxu0 %v460
      %497 = vmatprep.subr.bf16.mxu0 0
      %498 = vmatpush1.bf16.msra.mxu0 %v461
      %499 = vmatprep.subr.bf16.mxu0 0
      %500 = vmatpush1.bf16.msra.mxu0 %v462
      %501 = vmatprep.subr.bf16.mxu0 0
      %502 = vmatpush1.bf16.msra.mxu0 %v463
      %503 = vmatprep.subr.bf16.mxu0 0
      %504 = vmatpush1.bf16.msra.mxu0 %v464
      %505 = vmatprep.subr.bf16.mxu0 0
      %506 = vmatpush1.bf16.msra.mxu0 %v465
      %507 = vmatprep.subr.bf16.mxu0 0
      %508 = vmatpush1.bf16.msra.mxu0 %v466
      %509 = vmatprep.subr.bf16.mxu0 0
      %510 = vmatpush1.bf16.msra.mxu0 %v467
      %511 = vmatprep.subr.bf16.mxu0 0
      %512 = vmatpush1.bf16.msra.mxu0 %v468
      %513 = vmatprep.subr.bf16.mxu0 0
      %514 = vmatpush1.bf16.msra.mxu0 %v469
      %515 = vmatprep.subr.bf16.mxu0 0
      %516 = vmatpush1.bf16.msra.mxu0 %v470
      %517 = vmatprep.subr.bf16.mxu0 0
      %518 = vmatpush1.bf16.msra.mxu0 %v471
      %519 = vmatprep.subr.bf16.mxu0 0
      %520 = vmatpush1.bf16.msra.mxu0 %v472
      %521 = vmatprep.mubr.bf16.mxu0 %v378
      %522 = vmatmul.mubr.bf16.gmra.mrb[0].mxu0 %v377
      %v523 = vpop.f32.mrb[0].mxu0
      %v524 = vadd.f32 0.0, %v523
      %v525 = vpop.f32.mrb[0].mxu0
      %v526 = vpop.f32.mrb[0].mxu0
      %v527 = vadd.f32 0.0, %v526
      %v528 = vpop.f32.mrb[0].mxu0
      %529 = vmatprep.mubr.bf16.mxu0 %v380
      %530 = vmatmul.mubr.bf16.gmra.mrb[0].mxu0 %v379
      %v531 = vpop.f32.mrb[0].mxu0
      %v532 = vadd.f32 0.0, %v531
      %v533 = vpop.f32.mrb[0].mxu0
      %v534 = vpop.f32.mrb[0].mxu0
      %v535 = vadd.f32 0.0, %v534
      %v536 = vpop.f32.mrb[0].mxu0
      %537 = vmatprep.mubr.bf16.mxu0 %v382
      %538 = vmatmul.mubr.bf16.gmra.mrb[0].mxu0 %v381
      %v539 = vpop.f32.mrb[0].mxu0
      %v540 = vadd.f32 0.0, %v539
      %v541 = vpop.f32.mrb[0].mxu0
      %v542 = vpop.f32.mrb[0].mxu0
      %v543 = vadd.f32 0.0, %v542
      %v544 = vpop.f32.mrb[0].mxu0
      %545 = vmatprep.mubr.bf16.mxu0 %v384
      %546 = vmatmul.mubr.bf16.gmra.mrb[0].mxu0 %v383
      %v547 = vpop.f32.mrb[0].mxu0
      %v548 = vadd.f32 0.0, %v547
      %v549 = vpop.f32.mrb[0].mxu0
      %v550 = vpop.f32.mrb[0].mxu0
      %v551 = vadd.f32 0.0, %v550
      %v552 = vpop.f32.mrb[0].mxu0
      %553 = vdwg.mxu0
      %v554 = vadd.f32 %v302, %v524
      %v555 = vadd.f32 %v303, %v527
      %v556 = vadd.f32 %v304, %v532
      %v557 = vadd.f32 %v305, %v535
      %v558 = vadd.f32 %v306, %v540
      %v559 = vadd.f32 %v307, %v543
      %v560 = vadd.f32 %v308, %v548
      %v561 = vadd.f32 %v309, %v551
      %562 = vst [vmem:[#allocation2] sm:$0xff] %v554
      %563 = vst [vmem:[#allocation2 + $0x8] sm:$0xff] %v555
      %564 = vst [vmem:[#allocation2 + $0x10] sm:$0xff] %v556
      %565 = vst [vmem:[#allocation2 + $0x18] sm:$0xff] %v557
      %566 = vst [vmem:[#allocation2 + $0x20] sm:$0xff] %v558
      %567 = vst [vmem:[#allocation2 + $0x28] sm:$0xff] %v559
      %568 = vst [vmem:[#allocation2 + $0x30] sm:$0xff] %v560
      %569 = vst [vmem:[#allocation2 + $0x38] sm:$0xff] %v561
      %p570 = scmp.eq.s32.totalorder %s23, 6
      // Predicated region
      $region33: #{conv3d_bn.2} parent=27 // pred_check
        %p571 = pneg %p570
      $region34: #{conv3d_bn.2} parent=27 // pred_check_branch
        %573 = sbr.rel (%p571) target = $region36
      $region35: #{conv3d_bn.2} parent=27 // pred_region
        %v574 = vld [vmem:[#allocation2] sm:$0xff]
        %v575 = vld [vmem:[#allocation2 + $0x8] sm:$0xff]
        %v576 = vld [vmem:[#allocation2 + $0x10] sm:$0xff]
        %v577 = vld [vmem:[#allocation2 + $0x18] sm:$0xff]
        %v578 = vld [vmem:[#allocation2 + $0x20] sm:$0xff]
        %v579 = vld [vmem:[#allocation2 + $0x28] sm:$0xff]
        %v580 = vld [vmem:[#allocation2 + $0x30] sm:$0xff]
        %v581 = vld [vmem:[#allocation2 + $0x38] sm:$0xff]
        %v582 = vpack.c.bf16 %v575, %v574
        %v583 = vpack.c.bf16 %v577, %v576
        %v584 = vpack.c.bf16 %v579, %v578
        %v585 = vpack.c.bf16 %v581, %v580
        %v590 = vunpack.c.l.b16 %v582
        %v591 = vunpack.c.h.b16 %v582
        %v592 = vunpack.c.l.b16 %v583
        %v593 = vunpack.c.h.b16 %v583
        %v594 = vunpack.c.l.b16 %v584
        %v595 = vunpack.c.h.b16 %v584
        %v596 = vunpack.c.l.b16 %v585
        %v597 = vunpack.c.h.b16 %v585
        %v598 = vpack.c.b16 %v590, %v590
        %v599 = vpack.c.b16 %v591, %v591
        %v600 = vpack.c.b16 %v592, %v592
        %v601 = vpack.c.b16 %v593, %v593
        %v602 = vpack.c.b16 %v594, %v594
        %v603 = vpack.c.b16 %v595, %v595
        %v604 = vpack.c.b16 %v596, %v596
        %v605 = vpack.c.b16 %v597, %v597
        %614 = vst [vmem:[%s272] sm:$0xf] %v598
        %615 = vst [vmem:[%s272 + $0x4] sm:$0xf] %v599
        %616 = vst [vmem:[%s272 + $0x8] sm:$0xf] %v600
        %617 = vst [vmem:[%s272 + $0xc] sm:$0xf] %v601
        %618 = vst [vmem:[%s272 + $0x10] sm:$0xf] %v602
        %619 = vst [vmem:[%s272 + $0x14] sm:$0xf] %v603
        %620 = vst [vmem:[%s272 + $0x18] sm:$0xf] %v604
        %621 = vst [vmem:[%s272 + $0x1c] sm:$0xf] %v605
        %vm622 = vcmask 523264
        %v624 = vsel %vm622, 1.0, 0
        %626 = vmatprep.subr.mxu0 0.0
        %627 = vmatpush1.msra.mxu0 %v574
        %628 = vmatprep.subr.mxu0 0.0
        %629 = vmatpush1.msra.mxu0 %v575
        %630 = vmatprep.subr.mxu0 0.0
        %631 = vmatpush1.msra.mxu0 %v576
        %632 = vmatprep.subr.mxu0 0.0
        %633 = vmatpush1.msra.mxu0 %v577
        %634 = vmatprep.subr.mxu0 0.0
        %635 = vmatpush1.msra.mxu0 %v578
        %636 = vmatprep.subr.mxu0 0.0
        %637 = vmatpush1.msra.mxu0 %v579
        %638 = vmatprep.subr.mxu0 0.0
        %639 = vmatpush1.msra.mxu0 %v580
        %640 = vmatprep.subr.mxu0 0.0
        %641 = vmatpush1.msra.mxu0 %v581
        %642 = vmatprep.subr.mxu0 0.0
        %643 = vmatpush1.msra.mxu0 0.0
        %644 = vmatprep.subr.mxu0 0.0
        %645 = vmatpush1.msra.mxu0 0.0
        %646 = vmatprep.subr.mxu0 0.0
        %647 = vmatpush1.msra.mxu0 0.0
        %648 = vmatprep.subr.mxu0 0.0
        %649 = vmatpush1.msra.mxu0 0.0
        %650 = vmatprep.subr.mxu0 0.0
        %651 = vmatpush1.msra.mxu0 0.0
        %652 = vmatprep.subr.mxu0 0.0
        %653 = vmatpush1.msra.mxu0 0.0
        %654 = vmatprep.subr.mxu0 0.0
        %655 = vmatpush1.msra.mxu0 0.0
        %656 = vmatprep.subr.mxu0 0.0
        %657 = vmatpush1.msra.mxu0 0.0
        %658 = vmatprep.subr.mxu0 0.0
        %659 = vmatpush1.msra.mxu0 0.0
        %660 = vmatprep.subr.mxu0 0.0
        %661 = vmatpush1.msra.mxu0 0.0
        %662 = vmatprep.subr.mxu0 0.0
        %663 = vmatpush1.msra.mxu0 0.0
        %664 = vmatprep.subr.mxu0 0.0
        %665 = vmatpush1.msra.mxu0 0.0
        %666 = vmatprep.subr.mxu0 0.0
        %667 = vmatpush1.msra.mxu0 0.0
        %668 = vmatprep.subr.mxu0 0.0
        %669 = vmatpush1.msra.mxu0 0.0
        %670 = vmatprep.subr.mxu0 0.0
        %671 = vmatpush1.msra.mxu0 0.0
        %672 = vmatprep.subr.mxu0 0.0
        %673 = vmatpush1.msra.mxu0 0.0
        %674 = vmatprep.subr.mxu0 0.0
        %675 = vmatpush1.msra.mxu0 0.0
        %676 = vmatprep.subr.mxu0 0.0
        %677 = vmatpush1.msra.mxu0 0.0
        %678 = vmatprep.subr.mxu0 0.0
        %679 = vmatpush1.msra.mxu0 0.0
        %680 = vmatprep.subr.mxu0 0.0
        %681 = vmatpush1.msra.mxu0 0.0
        %682 = vmatprep.subr.mxu0 0.0
        %683 = vmatpush1.msra.mxu0 0.0
        %684 = vmatprep.subr.mxu0 0.0
        %685 = vmatpush1.msra.mxu0 0.0
        %686 = vmatprep.subr.mxu0 0.0
        %687 = vmatpush1.msra.mxu0 0.0
        %688 = vmatprep.subr.mxu0 0.0
        %689 = vmatpush1.msra.mxu0 0.0
        %690 = vmatprep.mubr.f32.mxu0 0.0
        %691 = vmatmul.mubr.f32.gmra.mrb[0].mxu0 %v624
        %v692 = vpop.f32.mrb[0].mxu0
        %v693 = vadd.f32 0.0, %v692
        %v694 = vpop.f32.mrb[0].mxu0
        %695 = vdwg.mxu0
        %696 = vst [vmem:[%s280] sm:$0xff] %v693
        %v697 = vmul.f32 %v574, %v574
        %v698 = vmul.f32 %v575, %v575
        %v699 = vmul.f32 %v576, %v576
        %v700 = vmul.f32 %v577, %v577
        %v701 = vmul.f32 %v578, %v578
        %v702 = vmul.f32 %v579, %v579
        %v703 = vmul.f32 %v580, %v580
        %v704 = vmul.f32 %v581, %v581
        %705 = vmatprep.subr.mxu0 0.0
        %706 = vmatpush1.msra.mxu0 %v697
        %707 = vmatprep.subr.mxu0 0.0
        %708 = vmatpush1.msra.mxu0 %v698
        %709 = vmatprep.subr.mxu0 0.0
        %710 = vmatpush1.msra.mxu0 %v699
        %711 = vmatprep.subr.mxu0 0.0
        %712 = vmatpush1.msra.mxu0 %v700
        %713 = vmatprep.subr.mxu0 0.0
        %714 = vmatpush1.msra.mxu0 %v701
        %715 = vmatprep.subr.mxu0 0.0
        %716 = vmatpush1.msra.mxu0 %v702
        %717 = vmatprep.subr.mxu0 0.0
        %718 = vmatpush1.msra.mxu0 %v703
        %719 = vmatprep.subr.mxu0 0.0
        %720 = vmatpush1.msra.mxu0 %v704
        %721 = vmatprep.subr.mxu0 0.0
        %722 = vmatpush1.msra.mxu0 0.0
        %723 = vmatprep.subr.mxu0 0.0
        %724 = vmatpush1.msra.mxu0 0.0
        %725 = vmatprep.subr.mxu0 0.0
        %726 = vmatpush1.msra.mxu0 0.0
        %727 = vmatprep.subr.mxu0 0.0
        %728 = vmatpush1.msra.mxu0 0.0
        %729 = vmatprep.subr.mxu0 0.0
        %730 = vmatpush1.msra.mxu0 0.0
        %731 = vmatprep.subr.mxu0 0.0
        %732 = vmatpush1.msra.mxu0 0.0
        %733 = vmatprep.subr.mxu0 0.0
        %734 = vmatpush1.msra.mxu0 0.0
        %735 = vmatprep.subr.mxu0 0.0
        %736 = vmatpush1.msra.mxu0 0.0
        %737 = vmatprep.subr.mxu0 0.0
        %738 = vmatpush1.msra.mxu0 0.0
        %739 = vmatprep.subr.mxu0 0.0
        %740 = vmatpush1.msra.mxu0 0.0
        %741 = vmatprep.subr.mxu0 0.0
        %742 = vmatpush1.msra.mxu0 0.0
        %743 = vmatprep.subr.mxu0 0.0
        %744 = vmatpush1.msra.mxu0 0.0
        %745 = vmatprep.subr.mxu0 0.0
        %746 = vmatpush1.msra.mxu0 0.0
        %747 = vmatprep.subr.mxu0 0.0
        %748 = vmatpush1.msra.mxu0 0.0
        %749 = vmatprep.subr.mxu0 0.0
        %750 = vmatpush1.msra.mxu0 0.0
        %751 = vmatprep.subr.mxu0 0.0
        %752 = vmatpush1.msra.mxu0 0.0
        %753 = vmatprep.subr.mxu0 0.0
        %754 = vmatpush1.msra.mxu0 0.0
        %755 = vmatprep.subr.mxu0 0.0
        %756 = vmatpush1.msra.mxu0 0.0
        %757 = vmatprep.subr.mxu0 0.0
        %758 = vmatpush1.msra.mxu0 0.0
        %759 = vmatprep.subr.mxu0 0.0
        %760 = vmatpush1.msra.mxu0 0.0
        %761 = vmatprep.subr.mxu0 0.0
        %762 = vmatpush1.msra.mxu0 0.0
        %763 = vmatprep.subr.mxu0 0.0
        %764 = vmatpush1.msra.mxu0 0.0
        %765 = vmatprep.subr.mxu0 0.0
        %766 = vmatpush1.msra.mxu0 0.0
        %767 = vmatprep.subr.mxu0 0.0
        %768 = vmatpush1.msra.mxu0 0.0
        %769 = vmatprep.mubr.f32.mxu0 0.0
        %770 = vmatmul.mubr.f32.gmra.mrb[0].mxu0 %v624
        %v771 = vpop.f32.mrb[0].mxu0
        %v772 = vadd.f32 0.0, %v771
        %v773 = vpop.f32.mrb[0].mxu0
        %774 = vdwg.mxu0
        %775 = vst [vmem:[%s288] sm:$0xff] %v772
      $region36: #{conv3d_bn.2} parent=27 // pred_fallthru
        _
      %p776 = scmp.lt.s32.totalorder %s21, 1
      %s777 = scalar_select %p776, %s21, 1
      %p778 = scmp.lt.s32.totalorder %s22, 7
      %s779 = scalar_select %p778, %s22, 7
      %s780 = smul.addr %s779, 8
      %s781 = smul.addr %s777, 64
      %s782 = sadd.s32 %s780, %s781
      %s783 = smul.addr %s782, 4
      %s784 = scalar_lea.vmem %s2, %s783
      %p785 = scmp.lt.s32.totalorder %s21, 1
      %s786 = scalar_select %p785, %s21, 1
      %p787 = scmp.lt.s32.totalorder %s22, 7
      %s788 = scalar_select %p787, %s22, 7
      %s789 = smul.addr %s786, 8
      %s790 = sadd.s32 %s788, %s789
      %s791 = smul.addr %s790, 8
      %s792 = scalar_lea.vmem %s3, %s791
      %p793 = scmp.lt.s32.totalorder %s21, 1
      %s794 = scalar_select %p793, %s21, 1
      %p795 = scmp.lt.s32.totalorder %s22, 7
      %s796 = scalar_select %p795, %s22, 7
      %s797 = smul.addr %s794, 8
      %s798 = sadd.s32 %s796, %s797
      %s799 = smul.addr %s798, 8
      %s800 = scalar_lea.vmem %s4, %s799
      // Predicated region
      $region37: #{conv3d_bn.2} parent=27 // pred_check
        %p801 = pneg %p106
      $region38: #{conv3d_bn.2} parent=27 // pred_check_branch
        %803 = sbr.rel (%p801) target = $region40
      $region39: #{conv3d_bn.2} parent=27 // pred_region
        _
      $region40: #{conv3d_bn.2} parent=27 // pred_fallthru
        _
      // Predicated region
      $region41: #{conv3d_bn.2} parent=27 // pred_check
        %p804 = pneg %p134
      $region42: #{conv3d_bn.2} parent=27 // pred_check_branch
        %806 = sbr.rel (%p804) target = $region44
      $region43: #{conv3d_bn.2} parent=27 // pred_region
        _
      $region44: #{conv3d_bn.2} parent=27 // pred_fallthru
        _
      // Predicated region
      $region45: #{conv3d_bn.2} parent=27 // pred_check
        %p807 = pneg %p162
      $region46: #{conv3d_bn.2} parent=27 // pred_check_branch
        %809 = sbr.rel (%p807) target = $region48
      $region47: #{conv3d_bn.2} parent=27 // pred_region
        _
      $region48: #{conv3d_bn.2} parent=27 // pred_fallthru
        _
    $region28: #{conv3d_bn.2} parent=5 // pred_fallthru
      _
    %p810 = scmp.le.s32.totalorder 2, %s11
    // Predicated region
    $region49: #{conv3d_bn.2} parent=5 // pred_check
      %p811 = pneg %p810
    $region50: #{conv3d_bn.2} parent=5 // pred_check_branch
      %813 = sbr.rel (%p811) target = $region52
    $region51: #{conv3d_bn.2} parent=5 // pred_region
      %s814 = ssub.s32 %s11, 2
      // Predicated region
      $region53: #{conv3d_bn.2} parent=51 // pred_check
        %p815 = pneg %p112
      $region54: #{conv3d_bn.2} parent=51 // pred_check_branch
        %817 = sbr.rel (%p815) target = $region56
      $region55: #{conv3d_bn.2} parent=51 // pred_region
        %p818 = scmp.lt.s32.totalorder %s24, 1
        %s819 = scalar_select %p818, %s24, 1
        %p820 = scmp.lt.s32.totalorder %s25, 7
        %s821 = scalar_select %p820, %s25, 7
        %s822 = smul.addr %s821, 8
        %s823 = smul.addr %s819, 64
        %s824 = sadd.s32 %s822, %s823
        %s825 = smul.addr %s824, 4
        %s826 = scalar_lea.vmem %s2, %s825
      $region56: #{conv3d_bn.2} parent=51 // pred_fallthru
        _
      // Predicated region
      $region57: #{conv3d_bn.2} parent=51 // pred_check
        %p827 = pneg %p140
      $region58: #{conv3d_bn.2} parent=51 // pred_check_branch
        %829 = sbr.rel (%p827) target = $region60
      $region59: #{conv3d_bn.2} parent=51 // pred_region
        %p830 = scmp.lt.s32.totalorder %s24, 1
        %s831 = scalar_select %p830, %s24, 1
        %p832 = scmp.lt.s32.totalorder %s25, 7
        %s833 = scalar_select %p832, %s25, 7
        %s834 = smul.addr %s831, 8
        %s835 = sadd.s32 %s833, %s834
        %s836 = smul.addr %s835, 8
        %s837 = scalar_lea.vmem %s3, %s836
      $region60: #{conv3d_bn.2} parent=51 // pred_fallthru
        _
      // Predicated region
      $region61: #{conv3d_bn.2} parent=51 // pred_check
        %p838 = pneg %p168
      $region62: #{conv3d_bn.2} parent=51 // pred_check_branch
        %840 = sbr.rel (%p838) target = $region64
      $region63: #{conv3d_bn.2} parent=51 // pred_region
        %p841 = scmp.lt.s32.totalorder %s24, 1
        %s842 = scalar_select %p841, %s24, 1
        %p843 = scmp.lt.s32.totalorder %s25, 7
        %s844 = scalar_select %p843, %s25, 7
        %s845 = smul.addr %s842, 8
        %s846 = sadd.s32 %s844, %s845
        %s847 = smul.addr %s846, 8
        %s848 = scalar_lea.vmem %s4, %s847
      $region64: #{conv3d_bn.2} parent=51 // pred_fallthru
        _
    $region52: #{conv3d_bn.2} parent=5 // pred_fallthru
      _
  $region6: #{conv3d_bn.2} parent=0 // loop_footer
    %s15 = sadd.s32 1, %s11
  $region7: #{conv3d_bn.2} parent=0 // loop_footer_branch
    %10 = sbr.rel target = $region3
  $region8: #{conv3d_bn.2} parent=0 // loop_exit
    _

</llo_original>
